<compile_context>
chip_gen: v5e
topology: v5e:2x2
jax: 0.10.0
libtpu: 0.0.40
codegen_flags: <defaults>
</compile_context>

<pallas_src>
import functools

import jax
import jax.numpy as jnp
from jax.experimental import pallas as pl
from jax.experimental.pallas import tpu as pltpu

LANES = 128
SUBLANES = 8


def _round_up(x, m):
    return (x + m - 1) // m * m


def _largest_divisor(n, cap, multiple=1):
    """Largest divisor of n that is <= cap and a multiple of `multiple` (or None)."""
    best = None
    d = 1
    while d * d <= n:
        if n % d == 0:
            for v in (d, n // d):
                if v <= cap and v % multiple == 0 and (best is None or v > best):
                    best = v
        d += 1
    return best


def _pick_row_tile(Ho, Wo, Kp, Cp, Cout, budget_bytes):
    """Largest output-row tile TH (dividing Ho) whose im2col working set fits."""
    for th in range(Ho, 0, -1):
        if Ho % th:
            continue
        m = th * Wo
        ws = (3 * m * Kp * 2          # patch + concat temporaries (bf16)
              + 2 * m * Cp * 4        # f32 matmul accumulator + slack
              + 2 * m * Cout * 2)     # bf16 output tile (double buffered)
        if ws <= budget_bytes:
            return th
    return 1


def conv_stats_kernel(x_ref, w_ref, y_ref, stats_ref, *,
                      KH, KW, TH, Wo, Cout, Kdim, Kp):
    """One (image, row-tile): aligned im2col -> one K=Kp MXU matmul (f32 acc)
    -> unpadded bf16 conv tile + per-channel partial BN statistics."""
    Cp = w_ref.shape[-1]
    t = pl.program_id(1)
    row0 = pl.multiple_of(t * TH, TH)

    # Rows needed for this output tile (includes the KH-1 halo rows).
    xt = x_ref[0, pl.ds(row0, TH + KH - 1), :, :]        # (TH+KH-1, Wp, Cin) bf16

    # im2col: fold the KH*KW taps into the contraction axis; append a zero
    # block so the last axis is Kp (multiple of 128) -> aligned reshape+matmul.
    # TODO(synk): for Cin >= 128 a tap-accumulation loop (no patch materialization)
    # would use less VMEM; for tiny Cin a roll-based tap generator would cut the
    # lane-shuffle cost of this concatenate further.
    cols = []
    for kh in range(KH):                                  # static unroll
        for kw in range(KW):
            cols.append(xt[kh:kh + TH, kw:kw + Wo, :])    # (TH, Wo, Cin)
    if Kp > Kdim:
        cols.append(jnp.zeros((TH, Wo, Kp - Kdim), dtype=xt.dtype))
    patch = jnp.concatenate(cols, axis=-1).reshape(TH * Wo, Kp)

    # Lane-dense accumulator: Cp = 128-aligned channels on the lane axis.
    acc = jnp.dot(patch, w_ref[...], preferred_element_type=jnp.float32)

    # Store only the real Cout channels, bf16 (unpadded intermediate).
    y_ref[...] = acc[:, :Cout].astype(y_ref.dtype).reshape(1, TH, Wo, Cout)

    # Partial BN statistics for this tile (reduced across the grid on host).
    s1 = jnp.sum(acc, axis=0, keepdims=True)              # (1, Cp)
    s2 = jnp.sum(acc * acc, axis=0, keepdims=True)        # (1, Cp)
    stats_ref[...] = jnp.concatenate([s1, s2], axis=0).reshape(1, 1, 2, Cp)


def bn_relu_kernel(y_ref, scale_ref, shift_ref, o_ref):
    """Fused per-channel affine (pre-folded scale/shift) + ReLU on flat rows."""
    y = y_ref[...].astype(jnp.float32)
    o_ref[...] = jnp.maximum(y * scale_ref[...] + shift_ref[...], 0.0).astype(o_ref.dtype)


def basic_conv(x_nchw, weight_oihw, gamma, beta, *, stride=1, padding=0,
               eps=1e-5, row_tile=None):
    """Pallas BasicConv forward. Supports stride=1, dilation=1, groups=1."""
    assert stride == 1, "only stride=1 implemented"
    # TODO(synk): stride>1 / dilation / groups and BatchNorm running-stat
    # (momentum) side effects are not implemented.
    N, Cin, H, W = x_nchw.shape
    Cout, Cin_w, KH, KW = weight_oihw.shape
    assert Cin_w == Cin

    Ho = H + 2 * padding - KH + 1
    Wo = W + 2 * padding - KW + 1
    Hp, Wp = H + 2 * padding, W + 2 * padding
    Kdim = KH * KW * Cin
    Kp = _round_up(Kdim, LANES)            # tile-aligned contraction axis
    Cp = _round_up(Cout, LANES)            # lane-dense matmul output
    Mtot = N * Ho * Wo

    # ---- host-side layout prep: NHWC, zero pad, bf16, pad weight K->Kp, Cout->Cp ----
    x = jnp.transpose(x_nchw, (0, 2, 3, 1)).astype(jnp.bfloat16)
    x = jnp.pad(x, ((0, 0), (padding, padding), (padding, padding), (0, 0)))

    w = jnp.transpose(weight_oihw, (2, 3, 1, 0)).reshape(Kdim, Cout)   # HWIO flat
    w = jnp.pad(w, ((0, Kp - Kdim), (0, Cp - Cout))).astype(jnp.bfloat16)

    # ---- spatial row tiling (keeps im2col working set bounded; needed on v7x) ----
    if row_tile is None:
        TH = _pick_row_tile(Ho, Wo, Kp, Cp, Cout, budget_bytes=8 * 1024 * 1024)
    else:
        assert Ho % row_tile == 0
        TH = row_tile
    nT = Ho // TH

    ws1 = (2 * Hp * Wp * Cin * 2 + 2 * Kp * Cp * 2
           + 2 * TH * Wo * Cout * 2 + 2 * 2 * Cp * 4
           + 3 * TH * Wo * Kp * 2 + 2 * TH * Wo * Cp * 4)
    vmem1 = int(min(max(2 * ws1, 32 * 1024 * 1024), 100 * 1024 * 1024))
    # TODO(synk): very large images keep the whole padded image VMEM-resident;
    # halo'd (Element-indexed) input blocks would shrink that further.

    # Cost estimate uses REAL Cout / unpadded bytes.
    flops = 2 * Mtot * Kdim * Cout
    bytes_accessed = (x.size * 2 + Kdim * Cout * 2
                      + Mtot * Cout * 2 + N * nT * 2 * Cp * 4)

    conv_out, stats = pl.pallas_call(
        functools.partial(conv_stats_kernel, KH=KH, KW=KW, TH=TH, Wo=Wo,
                          Cout=Cout, Kdim=Kdim, Kp=Kp),
        grid=(N, nT),
        in_specs=[
            pl.BlockSpec((1, Hp, Wp, Cin), lambda b, t: (b, 0, 0, 0)),  # image resident over t
            pl.BlockSpec((Kp, Cp), lambda b, t: (0, 0)),                # weights resident
        ],
        out_specs=[
            pl.BlockSpec((1, TH, Wo, Cout), lambda b, t: (b, t, 0, 0)),
            pl.BlockSpec((1, 1, 2, Cp), lambda b, t: (b, t, 0, 0)),
        ],
        out_shape=[
            jax.ShapeDtypeStruct((N, Ho, Wo, Cout), jnp.bfloat16),      # unpadded bf16
            jax.ShapeDtypeStruct((N, nT, 2, Cp), jnp.float32),
        ],
        compiler_params=pltpu.CompilerParams(
            dimension_semantics=("parallel", "parallel"),
            vmem_limit_bytes=vmem1),
        cost_estimate=pl.CostEstimate(flops=flops, transcendentals=0,
                                      bytes_accessed=bytes_accessed),
    )(x, w)

    # ---- global BN stats + pre-folded per-channel affine (tiny, plain JAX) ----
    # TODO(synk): E[x^2]-mean^2 (f32) kept for the single-reduction structure;
    # switch to a centered/Welford pass if conv outputs get a huge mean/spread ratio.
    total = jnp.sum(stats, axis=(0, 1))                          # (2, Cp)
    mean = total[0, :Cout] / Mtot
    var = jnp.maximum(total[1, :Cout] / Mtot - mean * mean, 0.0)  # biased (train-mode)
    inv = jax.lax.rsqrt(var + eps)
    g = gamma.astype(jnp.float32)
    scale = (g * inv).reshape(1, Cout)
    shift = (beta.astype(jnp.float32) - mean * g * inv).reshape(1, Cout)

    # ---- pass 2: fold (pixels x Cout) into 128 lanes when possible (lane-dense) ----
    if LANES % Cout == 0 and (Mtot * Cout) % LANES == 0:
        reps = LANES // Cout
        y2 = conv_out.reshape((Mtot * Cout) // LANES, LANES)
        scale2 = jnp.tile(scale, (1, reps))
        shift2 = jnp.tile(shift, (1, reps))
    else:
        y2 = conv_out.reshape(Mtot, Cout)
        scale2, shift2 = scale, shift
    Mrows, Ccols = y2.shape
    TM = _largest_divisor(Mrows, cap=4096, multiple=SUBLANES) or Mrows

    ws2 = 2 * TM * Ccols * (2 + 4) + 2 * Ccols * 4
    vmem2 = int(min(max(4 * ws2, 32 * 1024 * 1024), 100 * 1024 * 1024))

    out_flat = pl.pallas_call(
        bn_relu_kernel,
        grid=(Mrows // TM,),
        in_specs=[
            pl.BlockSpec((TM, Ccols), lambda i: (i, 0)),
            pl.BlockSpec((1, Ccols), lambda i: (0, 0)),
            pl.BlockSpec((1, Ccols), lambda i: (0, 0)),
        ],
        out_specs=pl.BlockSpec((TM, Ccols), lambda i: (i, 0)),
        out_shape=jax.ShapeDtypeStruct((Mrows, Ccols), x_nchw.dtype),
        compiler_params=pltpu.CompilerParams(
            dimension_semantics=("parallel",),
            vmem_limit_bytes=vmem2),
        cost_estimate=pl.CostEstimate(flops=3 * Mtot * Cout, transcendentals=0,
                                      bytes_accessed=Mtot * Cout * 2 + Mtot * Cout * 4),
    )(y2, scale2, shift2)

    # Unpadded data only: reshape + NHWC -> NCHW (cheap XLA).
    # TODO(synk): emitting NCHW directly from pass 2 would remove this transpose pass.
    out_nhwc = out_flat.reshape(N, Ho, Wo, Cout)
    return jnp.transpose(out_nhwc, (0, 3, 1, 2))


def _reference(x_nchw, weight_oihw, gamma, beta, *, padding, eps=1e-5):
    """Pure-JAX reference (same bf16 matmul inputs, f32 accumulation)."""
    x = jnp.transpose(x_nchw, (0, 2, 3, 1)).astype(jnp.bfloat16)
    w = jnp.transpose(weight_oihw, (2, 3, 1, 0)).astype(jnp.bfloat16)
    y = jax.lax.conv_general_dilated(
        x, w, window_strides=(1, 1),
        padding=[(padding, padding), (padding, padding)],
        dimension_numbers=("NHWC", "HWIO", "NHWC"),
        preferred_element_type=jnp.float32,
    )
    mean = jnp.mean(y, axis=(0, 1, 2), keepdims=True)
    var = jnp.mean((y - mean) ** 2, axis=(0, 1, 2), keepdims=True)
    y = (y - mean) * jax.lax.rsqrt(var + eps) * gamma + beta
    y = jnp.maximum(y, 0.0)
    return jnp.transpose(y, (0, 3, 1, 2))


if __name__ == "__main__":
    # BasicConv(in_ch=4, out_ch=8, kernel_size=3, stride=1, padding=1,
    #           relu=True, bn=True, bias=False)
    N, Cin, H, W = 2, 4, 16, 16
    Cout, K, PAD = 8, 3, 1

    key = jax.random.PRNGKey(0)
    kx, kw = jax.random.split(key)
    x = jax.random.normal(kx, (N, Cin, H, W), dtype=jnp.float32)
    conv_w = 0.1 * jax.random.normal(kw, (Cout, Cin, K, K), dtype=jnp.float32)
    bn_gamma = jnp.ones((Cout,), dtype=jnp.float32)   # BatchNorm2d default init
    bn_beta = jnp.zeros((Cout,), dtype=jnp.float32)

    ref = _reference(x, conv_w, bn_gamma, bn_beta, padding=PAD)

    # Default tiling (single row-tile per image at this size).
    out = basic_conv(x, conv_w, bn_gamma, bn_beta, stride=1, padding=PAD)
    out = jax.block_until_ready(out)
    assert out.shape == (N, Cout, H, W)
    assert jnp.max(jnp.abs(out - ref)) < 2e-2, "mismatch vs reference (default tiling)"

    # Forced spatial row tiling (exercises the 2-D grid + dynamic row offsets).
    out_t = basic_conv(x, conv_w, bn_gamma, bn_beta, stride=1, padding=PAD, row_tile=4)
    out_t = jax.block_until_ready(out_t)
    assert jnp.max(jnp.abs(out_t - ref)) < 2e-2, "mismatch vs reference (row_tile=4)"

    print("KERNEL_OK")
</pallas_src>

<mosaic_0001>
module attributes {stable_mosaic.version = 11 : i64} {
  func.func @conv_stats_kernel(%arg0: i32, %arg1: i32, %arg2: memref<1x18x18x4xbf16, #tpu.memory_space<vmem>>, %arg3: memref<128x128xbf16, #tpu.memory_space<vmem>>, %arg4: memref<1x16x16x8xbf16, #tpu.memory_space<vmem>>, %arg5: memref<1x1x2x128xf32, #tpu.memory_space<vmem>>) attributes {dimension_semantics = [#tpu.dimension_semantics<parallel>, #tpu.dimension_semantics<parallel>], iteration_bounds = array<i64: 2, 1>, scalar_prefetch = 0 : i64, scratch_operands = 0 : i64, tpu.core_type = #tpu.core_type<tc>, window_params = [{transform_indices = @transform_0, window_bounds = array<i64: 1, 18, 18, 4>}, {pipeline_mode = #tpu.pipeline_mode<synchronous>, transform_indices = @transform_1, window_bounds = array<i64: 128, 128>}, {transform_indices = @transform_2, window_bounds = array<i64: 1, 16, 16, 8>}, {transform_indices = @transform_3, window_bounds = array<i64: 1, 1, 2, 128>}]} {
    %c16_i32 = arith.constant 16 : i32
    %0 = arith.muli %arg1, %c16_i32 : i32
    %1 = tpu.assume_multiple %0, 16 : i32
    %c0 = arith.constant 0 : index
    %2 = arith.index_cast %1 : i32 to index
    %c0_0 = arith.constant 0 : index
    %c0_1 = arith.constant 0 : index
    %3 = vector.load %arg2[%c0, %2, %c0_0, %c0_1] : memref<1x18x18x4xbf16, #tpu.memory_space<vmem>>, vector<1x18x18x4xbf16>
    %4 = vector.shape_cast %3 : vector<1x18x18x4xbf16> to vector<18x18x4xbf16>
    %5 = vector.extract_strided_slice %4 {offsets = [0, 0, 0], sizes = [16, 16, 4], strides = [1, 1, 1]} : vector<18x18x4xbf16> to vector<16x16x4xbf16>
    %6 = vector.extract_strided_slice %4 {offsets = [0, 1, 0], sizes = [16, 16, 4], strides = [1, 1, 1]} : vector<18x18x4xbf16> to vector<16x16x4xbf16>
    %7 = vector.extract_strided_slice %4 {offsets = [0, 2, 0], sizes = [16, 16, 4], strides = [1, 1, 1]} : vector<18x18x4xbf16> to vector<16x16x4xbf16>
    %8 = vector.extract_strided_slice %4 {offsets = [1, 0, 0], sizes = [16, 16, 4], strides = [1, 1, 1]} : vector<18x18x4xbf16> to vector<16x16x4xbf16>
    %9 = vector.extract_strided_slice %4 {offsets = [1, 1, 0], sizes = [16, 16, 4], strides = [1, 1, 1]} : vector<18x18x4xbf16> to vector<16x16x4xbf16>
    %10 = vector.extract_strided_slice %4 {offsets = [1, 2, 0], sizes = [16, 16, 4], strides = [1, 1, 1]} : vector<18x18x4xbf16> to vector<16x16x4xbf16>
    %11 = vector.extract_strided_slice %4 {offsets = [2, 0, 0], sizes = [16, 16, 4], strides = [1, 1, 1]} : vector<18x18x4xbf16> to vector<16x16x4xbf16>
    %12 = vector.extract_strided_slice %4 {offsets = [2, 1, 0], sizes = [16, 16, 4], strides = [1, 1, 1]} : vector<18x18x4xbf16> to vector<16x16x4xbf16>
    %13 = vector.extract_strided_slice %4 {offsets = [2, 2, 0], sizes = [16, 16, 4], strides = [1, 1, 1]} : vector<18x18x4xbf16> to vector<16x16x4xbf16>
    %cst = arith.constant 0.000000e+00 : bf16
    %14 = vector.broadcast %cst : bf16 to vector<16x16x92xbf16>
    %15 = tpu.concatenate %5, %6, %7, %8, %9, %10, %11, %12, %13, %14 in 2 : vector<16x16x4xbf16>, vector<16x16x4xbf16>, vector<16x16x4xbf16>, vector<16x16x4xbf16>, vector<16x16x4xbf16>, vector<16x16x4xbf16>, vector<16x16x4xbf16>, vector<16x16x4xbf16>, vector<16x16x4xbf16>, vector<16x16x92xbf16> -> vector<16x16x128xbf16>
    %16 = vector.shape_cast %15 : vector<16x16x128xbf16> to vector<256x128xbf16>
    %c0_2 = arith.constant 0 : index
    %c0_3 = arith.constant 0 : index
    %17 = vector.load %arg3[%c0_2, %c0_3] : memref<128x128xbf16, #tpu.memory_space<vmem>>, vector<128x128xbf16>
    %cst_4 = arith.constant dense<0.000000e+00> : vector<256x128xf32>
    %18 = tpu.matmul %16, %17, %cst_4 {dimension_numbers = #tpu.dot_dimension_numbers<[1], [0], [0], [1], [0, 0, 1, 1], [], []>} : vector<256x128xbf16>, vector<128x128xbf16>, vector<256x128xf32> -> vector<256x128xf32>
    %19 = vector.extract_strided_slice %18 {offsets = [0, 0], sizes = [256, 8], strides = [1, 1]} : vector<256x128xf32> to vector<256x8xf32>
    %20 = arith.truncf %19 : vector<256x8xf32> to vector<256x8xbf16>
    %21 = vector.shape_cast %20 : vector<256x8xbf16> to vector<1x16x16x8xbf16>
    %c0_5 = arith.constant 0 : index
    %c0_6 = arith.constant 0 : index
    %c0_7 = arith.constant 0 : index
    %c0_8 = arith.constant 0 : index
    %22 = vector.load %arg4[%c0_5, %c0_6, %c0_7, %c0_8] : memref<1x16x16x8xbf16, #tpu.memory_space<vmem>>, vector<1x16x16x8xbf16>
    tpu.vector_store %arg4[%c0_5, %c0_6, %c0_7, %c0_8], %21 {strides = array<i32>} : memref<1x16x16x8xbf16, #tpu.memory_space<vmem>>, vector<1x16x16x8xbf16>,
    %cst_9 = arith.constant dense<0.000000e+00> : vector<128xf32>
    %23 = vector.multi_reduction <add>, %18, %cst_9 [0] : vector<256x128xf32> to vector<128xf32>
    %24 = vector.shape_cast %23 : vector<128xf32> to vector<1x128xf32>
    %25 = arith.mulf %18, %18 : vector<256x128xf32>
    %cst_10 = arith.constant dense<0.000000e+00> : vector<128xf32>
    %26 = vector.multi_reduction <add>, %25, %cst_10 [0] : vector<256x128xf32> to vector<128xf32>
    %27 = vector.shape_cast %26 : vector<128xf32> to vector<1x128xf32>
    %28 = tpu.concatenate %24, %27 in 0 : vector<1x128xf32>, vector<1x128xf32> -> vector<2x128xf32>
    %29 = vector.shape_cast %28 : vector<2x128xf32> to vector<1x1x2x128xf32>
    %c0_11 = arith.constant 0 : index
    %c0_12 = arith.constant 0 : index
    %c0_13 = arith.constant 0 : index
    %c0_14 = arith.constant 0 : index
    %30 = vector.load %arg5[%c0_11, %c0_12, %c0_13, %c0_14] : memref<1x1x2x128xf32, #tpu.memory_space<vmem>>, vector<1x1x2x128xf32>
    tpu.vector_store %arg5[%c0_11, %c0_12, %c0_13, %c0_14], %29 {strides = array<i32>} : memref<1x1x2x128xf32, #tpu.memory_space<vmem>>, vector<1x1x2x128xf32>,
    return
  }
  func.func @transform_0(%arg0: i32, %arg1: i32) -> (i32, i32, i32, i32) {
    %c0_i32 = arith.constant 0 : i32
    %c0_i32_0 = arith.constant 0 : i32
    %c0_i32_1 = arith.constant 0 : i32
    %c0_i32_2 = arith.constant 0 : i32
    return %arg0, %c0_i32, %c0_i32_0, %c0_i32_1 : i32, i32, i32, i32
  }
  func.func @transform_1(%arg0: i32, %arg1: i32) -> (i32, i32) {
    %c0_i32 = arith.constant 0 : i32
    %c0_i32_0 = arith.constant 0 : i32
    %c0_i32_1 = arith.constant 0 : i32
    return %c0_i32, %c0_i32_0 : i32, i32
  }
  func.func @transform_2(%arg0: i32, %arg1: i32) -> (i32, i32, i32, i32) {
    %c0_i32 = arith.constant 0 : i32
    %c0_i32_0 = arith.constant 0 : i32
    %c0_i32_1 = arith.constant 0 : i32
    return %arg0, %arg1, %c0_i32, %c0_i32_0 : i32, i32, i32, i32
  }
  func.func @transform_3(%arg0: i32, %arg1: i32) -> (i32, i32, i32, i32) {
    %c0_i32 = arith.constant 0 : i32
    %c0_i32_0 = arith.constant 0 : i32
    %c0_i32_1 = arith.constant 0 : i32
    return %arg0, %arg1, %c0_i32, %c0_i32_0 : i32, i32, i32, i32
  }
}

</mosaic_0001>

<llo_original>
// kernel: tpu_custom_call.1
$region0: #{tpu_custom_call.1}
  #allocation0 [shape = 'u32[]', space=smem, size = 0x4, offset = 0x4, fixed_abs, tag = 'smem constant byte address 0x4 - core index']
  #allocation1 [shape = 'u32[72,128]{1,0:T(1,128)}', space=vmem, size = 0x9000, scoped, tag = 'internal scratch']
  %s0 = inlined_call_operand.vmem [shape: bf16[2,18,18,4], index: 0, kind: input, shape index: {}]
  %s1 = inlined_call_operand.vmem [shape: bf16[128,128], index: 1, kind: input, shape index: {}]
  %s2 = inlined_call_operand.vmem [shape: bf16[2,16,16,8], index: 2, kind: output, shape index: {0}]
  %s3 = inlined_call_operand.hbm [shape: f32[2,1,2,128], index: 3, kind: output, shape index: {1}]
  %4 = xla_tuple %s2, %s3
  %s5 = sld [smem:[#allocation0]]
  $region49: #{tpu_custom_call.1} parent=0
    _
  %s7 = ssub.s32 1, %s5
  %s8 = scalar_select 0, %s7, %s5
  $region1: #{tpu_custom_call.1} parent=0
    #allocation2 [shape = 'u8[2048]{0}', space=vmem, size = 0x800, scoped, tag = 'output window, operand 1']
    #allocation3 [shape = 's32[2]{0}', space=sflag, size = 0x8, scoped, tag = 'scoped memory for tpu_custom_call.1']
    %9 = vsyncpa [#allocation3], 0
    %s10 = scalar_lea.sflag [#allocation3], 1
    %11 = vsyncpa %s10, 0
    loop: start=0, step=1, limit=4
    $region2: #{tpu_custom_call.1} parent=1 // loop_pre_header
      _
    $region3: #{tpu_custom_call.1} parent=1 // loop_header
      %s13 = sphi 0, %s17
      %p14 = scmp.ge.s32.totalorder %s13, 4
      %s20 = sphi 0, %s32
      %s21 = sphi 0, %s28
      %s22 = sphi 0, %s20
      %s23 = sphi 0, %s21
      %s24 = sphi 0, %s22
      %s25 = sphi 0, %s23
      %s35 = sphi 0, %s37
      %s38 = sphi 0, %s35
      %s39 = sphi 0, %s38
      %s55 = sphi 0, %s39
      %s59 = sphi 0, %s59
      %s61 = sphi 0, %s59
      %s62 = sphi 0, %s61
      %s76 = sphi 0, %s62
      %s84 = sphi 0, %s86
      %s87 = sphi 0, %s84
      %s88 = sphi 0, %s87
      %s104 = sphi 0, %s88
      %s112 = sphi 0, %s114
      %s115 = sphi 0, %s112
      %s116 = sphi 0, %s115
      %s132 = sphi 0, %s116
    $region4: #{tpu_custom_call.1} parent=1 // loop_header_branch
      %16 = sbr.rel (%p14) target = $region8
    $region5: #{tpu_custom_call.1} parent=1 // loop_body
      %s18 = ssub.s32 %s13, 1
      %s19 = ssub.s32 %s13, 2
      %s26 = sadd.s32 1, %s21
      %p27 = scmp.ge.s32.totalorder %s26, 1
      %s28 = scalar_select %p27, 0, %s26
      %s29 = sadd.s32 1, %s20
      %s30 = scalar_select %p27, %s29, %s20
      %p31 = scmp.ge.s32.totalorder %s30, 2
      %s32 = scalar_select %p31, 0, %s30
      %s33 = ssub.s32 %s20, %s32
      %p34 = scmp.eq.s32.totalorder %s33, 0
      %s36 = sadd.s32 %s35, 1
      %s37 = scalar_select %p34, %s35, %s36
      %p40 = pneg %p34
      %p41 = scmp.eq.s32.totalorder %s13, 1
      %p42 = por %p40, %p41
      %p43 = scmp.ne.s32.totalorder %s35, %s38
      %p44 = scmp.eq.s32.totalorder %s13, 0
      %p45 = por %p43, %p44
      %p46 = scmp.ne.s32.totalorder %s35, %s38
      %p47 = scmp.eq.s32.totalorder %s18, 1
      %p48 = por %p46, %p47
      %p49 = scmp.ne.s32.totalorder %s38, %s39
      %p50 = scmp.eq.s32.totalorder %s18, 0
      %p51 = por %p49, %p50
      %p52 = scmp.ne.s32.totalorder %s38, %s39
      %p53 = scmp.eq.s32.totalorder %s19, 1
      %p54 = por %p52, %p53
      %p56 = scmp.ne.s32.totalorder %s39, %s55
      %p57 = scmp.eq.s32.totalorder %s19, 0
      %p58 = por %p56, %p57
      %s60 = sadd.s32 %s59, 1
      %p63 = scmp.eq.s32.totalorder %s13, 1
      %p64 = scmp.ne.s32.totalorder %s59, %s61
      %p65 = scmp.eq.s32.totalorder %s13, 0
      %p66 = por %p64, %p65
      %p67 = scmp.ne.s32.totalorder %s59, %s61
      %p68 = scmp.eq.s32.totalorder %s18, 1
      %p69 = por %p67, %p68
      %p70 = scmp.ne.s32.totalorder %s61, %s62
      %p71 = scmp.eq.s32.totalorder %s18, 0
      %p72 = por %p70, %p71
      %p73 = scmp.ne.s32.totalorder %s61, %s62
      %p74 = scmp.eq.s32.totalorder %s19, 1
      %p75 = por %p73, %p74
      %p77 = scmp.ne.s32.totalorder %s62, %s76
      %p78 = scmp.eq.s32.totalorder %s19, 0
      %p79 = por %p77, %p78
      %s80 = ssub.s32 %s20, %s32
      %s81 = ssub.s32 %s21, %s28
      %s82 = sor.u32 %s80, %s81
      %p83 = scmp.eq.s32.totalorder %s82, 0
      %s85 = sadd.s32 %s84, 1
      %s86 = scalar_select %p83, %s84, %s85
      %p89 = pneg %p83
      %p90 = scmp.eq.s32.totalorder %s13, 1
      %p91 = por %p89, %p90
      %p92 = scmp.ne.s32.totalorder %s84, %s87
      %p93 = scmp.eq.s32.totalorder %s13, 0
      %p94 = por %p92, %p93
      %p95 = scmp.ne.s32.totalorder %s84, %s87
      %p96 = scmp.eq.s32.totalorder %s18, 1
      %p97 = por %p95, %p96
      %p98 = scmp.ne.s32.totalorder %s87, %s88
      %p99 = scmp.eq.s32.totalorder %s18, 0
      %p100 = por %p98, %p99
      %p101 = scmp.ne.s32.totalorder %s87, %s88
      %p102 = scmp.eq.s32.totalorder %s19, 1
      %p103 = por %p101, %p102
      %p105 = scmp.ne.s32.totalorder %s88, %s104
      %p106 = scmp.eq.s32.totalorder %s19, 0
      %p107 = por %p105, %p106
      %s108 = ssub.s32 %s20, %s32
      %s109 = ssub.s32 %s21, %s28
      %s110 = sor.u32 %s108, %s109
      %p111 = scmp.eq.s32.totalorder %s110, 0
      %s113 = sadd.s32 %s112, 1
      %s114 = scalar_select %p111, %s112, %s113
      %p117 = pneg %p111
      %p118 = scmp.eq.s32.totalorder %s13, 1
      %p119 = por %p117, %p118
      %p120 = scmp.ne.s32.totalorder %s112, %s115
      %p121 = scmp.eq.s32.totalorder %s13, 0
      %p122 = por %p120, %p121
      %p123 = scmp.ne.s32.totalorder %s112, %s115
      %p124 = scmp.eq.s32.totalorder %s18, 1
      %p125 = por %p123, %p124
      %p126 = scmp.ne.s32.totalorder %s115, %s116
      %p127 = scmp.eq.s32.totalorder %s18, 0
      %p128 = por %p126, %p127
      %p129 = scmp.ne.s32.totalorder %s115, %s116
      %p130 = scmp.eq.s32.totalorder %s19, 1
      %p131 = por %p129, %p130
      %p133 = scmp.ne.s32.totalorder %s116, %s132
      %p134 = scmp.eq.s32.totalorder %s19, 0
      %p135 = por %p133, %p134
      %p136 = scmp.le.s32.totalorder 1, %s13
      %p137 = scmp.lt.s32.totalorder %s13, 3
      %p138 = pnand %p136, %p137
      %p139 = pneg %p138
      // Predicated region
      $region9: #{tpu_custom_call.1} parent=5 // pred_check
        _
      $region10: #{tpu_custom_call.1} parent=5 // pred_check_branch
        %141 = sbr.rel (%p138) target = $region12
      $region11: #{tpu_custom_call.1} parent=5 // pred_region
        %s142 = ssub.s32 %s13, 1
        // Predicated region
        $region13: #{tpu_custom_call.1} parent=11 // pred_check
          %p143 = pneg %p72
        $region14: #{tpu_custom_call.1} parent=11 // pred_check_branch
          %145 = sbr.rel (%p143) target = $region16
        $region15: #{tpu_custom_call.1} parent=11 // pred_region
          _
        $region16: #{tpu_custom_call.1} parent=11 // pred_fallthru
          _
      $region12: #{tpu_custom_call.1} parent=5 // pred_fallthru
        _
      %p146 = scmp.lt.s32.totalorder %s13, 2
      // Predicated region
      $region17: #{tpu_custom_call.1} parent=5 // pred_check
        %p147 = pneg %p146
      $region18: #{tpu_custom_call.1} parent=5 // pred_check_branch
        %149 = sbr.rel (%p147) target = $region20
      $region19: #{tpu_custom_call.1} parent=5 // pred_region
        // Predicated region
        $region21: #{tpu_custom_call.1} parent=19 // pred_check
          %p150 = pneg %p45
        $region22: #{tpu_custom_call.1} parent=19 // pred_check_branch
          %152 = sbr.rel (%p150) target = $region24
        $region23: #{tpu_custom_call.1} parent=19 // pred_region
          %p153 = scmp.lt.s32.totalorder %s20, 1
          %s154 = scalar_select %p153, %s20, 1
          %s155 = smul.addr %s154, 54
          %s156 = smul.addr %s155, 4
          %s157 = scalar_lea.vmem %s0, %s156
        $region24: #{tpu_custom_call.1} parent=19 // pred_fallthru
          _
      $region20: #{tpu_custom_call.1} parent=5 // pred_fallthru
        _
      %p158 = scmp.le.s32.totalorder 1, %s13
      %p159 = scmp.lt.s32.totalorder %s13, 3
      %p160 = pnand %p158, %p159
      %p161 = pneg %p160
      // Predicated region
      $region25: #{tpu_custom_call.1} parent=5 // pred_check
        _
      $region26: #{tpu_custom_call.1} parent=5 // pred_check_branch
        %163 = sbr.rel (%p160) target = $region28
      $region27: #{tpu_custom_call.1} parent=5 // pred_region
        %s164 = ssub.s32 %s13, 1
        %p165 = scmp.lt.s32.totalorder %s22, 1
        %s166 = scalar_select %p165, %s22, 1
        %s167 = smul.addr %s166, 54
        %s168 = smul.addr %s167, 4
        %s169 = scalar_lea.vmem %s0, %s168
        %p170 = pneg %p51
        %p171 = pneg %p48
        %p172 = pneg %p72
        %p173 = pneg %p69
        %p174 = pneg %p100
        %p175 = pneg %p97
        %s176 = smul.u32 16, %s23
        %p177 = scmp.lt.s32.totalorder %s22, 1
        %s178 = scalar_select %p177, %s22, 1
        %p179 = scmp.lt.s32.totalorder %s176, 15
        %s180 = scalar_select %p179, %s176, 15
        %s181 = smul.addr %s180, 2
        %s182 = smul.addr %s178, 32
        %s183 = sadd.s32 %s181, %s182
        %s184 = smul.addr %s183, 4
        %s185 = scalar_lea.vmem %s2, %s184
        %p186 = pneg %p128
        %p187 = pneg %p125
        %s188 = sand.u32 %s115, 1
        %s189 = scalar_lea.sflag [#allocation3], %s188
        %s190 = sand.u32 %s115, 1
        %s191 = smul.addr %s190, 2
        %s192 = scalar_lea.vmem [#allocation2], %s191
        %p193 = scmp.lt.s32.totalorder %s22, 1
        %s194 = scalar_select %p193, %s22, 1
        %s195 = smul.addr %s194, 54
        %s196 = smul.addr %s195, 4
        %s197 = scalar_lea.vmem %s0, %s196
        %s198 = smul.u32 16, %s23
        %p199 = scmp.lt.s32.totalorder %s22, 1
        %s200 = scalar_select %p199, %s22, 1
        %p201 = scmp.lt.s32.totalorder %s198, 15
        %s202 = scalar_select %p201, %s198, 15
        %s203 = smul.addr %s202, 2
        %s204 = smul.addr %s200, 32
        %s205 = sadd.s32 %s203, %s204
        %s206 = smul.addr %s205, 4
        %s207 = scalar_lea.vmem %s2, %s206
        %s208 = smul.u32 16, %s23
        %s210 = smul.u32 %s23, 16
        %s211 = smul.u32 %s210, 3
        %s212 = smul.addr %s211, 4
        %s213 = scalar_lea.vmem %s197, %s212
        %v214 = vld [vmem:[%s213] sm:$0xf]
        %v215 = vld [vmem:[%s213 + $0x4] sm:$0xf]
        %v216 = vld [vmem:[%s213 + $0x8] sm:$0x1]
        %v217 = vld [vmem:[%s213 + $0xc] sm:$0xf]
        %v218 = vld [vmem:[%s213 + $0x10] sm:$0xf]
        %v219 = vld [vmem:[%s213 + $0x14] sm:$0x1]
        %v220 = vld [vmem:[%s213 + $0x18] sm:$0xf]
        %v221 = vld [vmem:[%s213 + $0x1c] sm:$0xf]
        %v222 = vld [vmem:[%s213 + $0x20] sm:$0x1]
        %v223 = vld [vmem:[%s213 + $0x24] sm:$0xf]
        %v224 = vld [vmem:[%s213 + $0x28] sm:$0xf]
        %v225 = vld [vmem:[%s213 + $0x2c] sm:$0x1]
        %v226 = vld [vmem:[%s213 + $0x30] sm:$0xf]
        %v227 = vld [vmem:[%s213 + $0x34] sm:$0xf]
        %v228 = vld [vmem:[%s213 + $0x38] sm:$0x1]
        %v229 = vld [vmem:[%s213 + $0x3c] sm:$0xf]
        %v230 = vld [vmem:[%s213 + $0x40] sm:$0xf]
        %v231 = vld [vmem:[%s213 + $0x44] sm:$0x1]
        %v232 = vld [vmem:[%s213 + $0x48] sm:$0xf]
        %v233 = vld [vmem:[%s213 + $0x4c] sm:$0xf]
        %v234 = vld [vmem:[%s213 + $0x50] sm:$0x1]
        %v235 = vld [vmem:[%s213 + $0x54] sm:$0xf]
        %v236 = vld [vmem:[%s213 + $0x58] sm:$0xf]
        %v237 = vld [vmem:[%s213 + $0x5c] sm:$0x1]
        %v238 = vld [vmem:[%s213 + $0x60] sm:$0xf]
        %v239 = vld [vmem:[%s213 + $0x64] sm:$0xf]
        %v240 = vld [vmem:[%s213 + $0x68] sm:$0x1]
        %v241 = vld [vmem:[%s213 + $0x6c] sm:$0xf]
        %v242 = vld [vmem:[%s213 + $0x70] sm:$0xf]
        %v243 = vld [vmem:[%s213 + $0x74] sm:$0x1]
        %v244 = vld [vmem:[%s213 + $0x78] sm:$0xf]
        %v245 = vld [vmem:[%s213 + $0x7c] sm:$0xf]
        %v246 = vld [vmem:[%s213 + $0x80] sm:$0x1]
        %v247 = vld [vmem:[%s213 + $0x84] sm:$0xf]
        %v248 = vld [vmem:[%s213 + $0x88] sm:$0xf]
        %v249 = vld [vmem:[%s213 + $0x8c] sm:$0x1]
        %v250 = vld [vmem:[%s213 + $0x90] sm:$0xf]
        %v251 = vld [vmem:[%s213 + $0x94] sm:$0xf]
        %v252 = vld [vmem:[%s213 + $0x98] sm:$0x1]
        %v253 = vld [vmem:[%s213 + $0x9c] sm:$0xf]
        %v254 = vld [vmem:[%s213 + $0xa0] sm:$0xf]
        %v255 = vld [vmem:[%s213 + $0xa4] sm:$0x1]
        %v256 = vld [vmem:[%s213 + $0xa8] sm:$0xf]
        %v257 = vld [vmem:[%s213 + $0xac] sm:$0xf]
        %v258 = vld [vmem:[%s213 + $0xb0] sm:$0x1]
        %v259 = vld [vmem:[%s213 + $0xb4] sm:$0xf]
        %v260 = vld [vmem:[%s213 + $0xb8] sm:$0xf]
        %v261 = vld [vmem:[%s213 + $0xbc] sm:$0x1]
        %v262 = vld [vmem:[%s213 + $0xc0] sm:$0xf]
        %v263 = vld [vmem:[%s213 + $0xc4] sm:$0xf]
        %v264 = vld [vmem:[%s213 + $0xc8] sm:$0x1]
        %v265 = vld [vmem:[%s213 + $0xcc] sm:$0xf]
        %v266 = vld [vmem:[%s213 + $0xd0] sm:$0xf]
        %v267 = vld [vmem:[%s213 + $0xd4] sm:$0x1]
        %v300 = vunpack.c.l.b16 %v214
        %v301 = vunpack.c.l.b16 %v215
        %v302 = vunpack.c.l.b16 %v217
        %v303 = vunpack.c.l.b16 %v218
        %v304 = vunpack.c.l.b16 %v220
        %v305 = vunpack.c.l.b16 %v221
        %v306 = vunpack.c.l.b16 %v223
        %v307 = vunpack.c.l.b16 %v224
        %v308 = vunpack.c.l.b16 %v226
        %v309 = vunpack.c.l.b16 %v227
        %v310 = vunpack.c.l.b16 %v229
        %v311 = vunpack.c.l.b16 %v230
        %v312 = vunpack.c.l.b16 %v232
        %v313 = vunpack.c.l.b16 %v233
        %v314 = vunpack.c.l.b16 %v235
        %v315 = vunpack.c.l.b16 %v236
        %v316 = vunpack.c.l.b16 %v238
        %v317 = vunpack.c.l.b16 %v239
        %v318 = vunpack.c.l.b16 %v241
        %v319 = vunpack.c.l.b16 %v242
        %v320 = vunpack.c.l.b16 %v244
        %v321 = vunpack.c.l.b16 %v245
        %v322 = vunpack.c.l.b16 %v247
        %v323 = vunpack.c.l.b16 %v248
        %v324 = vunpack.c.l.b16 %v250
        %v325 = vunpack.c.l.b16 %v251
        %v326 = vunpack.c.l.b16 %v253
        %v327 = vunpack.c.l.b16 %v254
        %v328 = vunpack.c.l.b16 %v256
        %v329 = vunpack.c.l.b16 %v257
        %v330 = vunpack.c.l.b16 %v259
        %v331 = vunpack.c.l.b16 %v260
        %v332 = vpack.c.b16 %v301, %v300
        %v333 = vpack.c.b16 %v303, %v302
        %v334 = vpack.c.b16 %v305, %v304
        %v335 = vpack.c.b16 %v307, %v306
        %v336 = vpack.c.b16 %v309, %v308
        %v337 = vpack.c.b16 %v311, %v310
        %v338 = vpack.c.b16 %v313, %v312
        %v339 = vpack.c.b16 %v315, %v314
        %v340 = vpack.c.b16 %v317, %v316
        %v341 = vpack.c.b16 %v319, %v318
        %v342 = vpack.c.b16 %v321, %v320
        %v343 = vpack.c.b16 %v323, %v322
        %v344 = vpack.c.b16 %v325, %v324
        %v345 = vpack.c.b16 %v327, %v326
        %v346 = vpack.c.b16 %v329, %v328
        %v347 = vpack.c.b16 %v331, %v330
        %v364 = vunpack.c.l.b16 %v216
        %v365 = vunpack.c.l.b16 %v219
        %v366 = vunpack.c.l.b16 %v222
        %v367 = vunpack.c.l.b16 %v225
        %v368 = vunpack.c.l.b16 %v228
        %v369 = vunpack.c.l.b16 %v231
        %v370 = vunpack.c.l.b16 %v234
        %v371 = vunpack.c.l.b16 %v237
        %v372 = vunpack.c.l.b16 %v240
        %v373 = vunpack.c.l.b16 %v243
        %v374 = vunpack.c.l.b16 %v246
        %v375 = vunpack.c.l.b16 %v249
        %v376 = vunpack.c.l.b16 %v252
        %v377 = vunpack.c.l.b16 %v255
        %v378 = vunpack.c.l.b16 %v258
        %v379 = vunpack.c.l.b16 %v261
        %v380 = vpack.c.b16 %v364, %v364
        %v381 = vpack.c.b16 %v365, %v365
        %v382 = vpack.c.b16 %v366, %v366
        %v383 = vpack.c.b16 %v367, %v367
        %v384 = vpack.c.b16 %v368, %v368
        %v385 = vpack.c.b16 %v369, %v369
        %v386 = vpack.c.b16 %v370, %v370
        %v387 = vpack.c.b16 %v371, %v371
        %v388 = vpack.c.b16 %v372, %v372
        %v389 = vpack.c.b16 %v373, %v373
        %v390 = vpack.c.b16 %v374, %v374
        %v391 = vpack.c.b16 %v375, %v375
        %v392 = vpack.c.b16 %v376, %v376
        %v393 = vpack.c.b16 %v377, %v377
        %v394 = vpack.c.b16 %v378, %v378
        %v395 = vpack.c.b16 %v379, %v379
        %vm396 = vsmask.f32 7424
        %v398 = vshrl.u32 %v332, 16
        %v400 = vshll.u32 %v332, 16
        %v402 = vrot.slane %v400, 1
        %v403 = vor.u32 %v398, %v402
        %v405 = vshll.u32 %v380, 16
        %v407 = vrot.slane %v405, 1
        %v408 = vsel %vm396, %v403, %v407
        %v410 = vshrl.u32 %v333, 16
        %v412 = vshll.u32 %v333, 16
        %v414 = vrot.slane %v412, 1
        %v415 = vor.u32 %v410, %v414
        %v417 = vshll.u32 %v381, 16
        %v419 = vrot.slane %v417, 1
        %v420 = vsel %vm396, %v415, %v419
        %v422 = vshrl.u32 %v334, 16
        %v424 = vshll.u32 %v334, 16
        %v426 = vrot.slane %v424, 1
        %v427 = vor.u32 %v422, %v426
        %v429 = vshll.u32 %v382, 16
        %v431 = vrot.slane %v429, 1
        %v432 = vsel %vm396, %v427, %v431
        %v434 = vshrl.u32 %v335, 16
        %v436 = vshll.u32 %v335, 16
        %v438 = vrot.slane %v436, 1
        %v439 = vor.u32 %v434, %v438
        %v441 = vshll.u32 %v383, 16
        %v443 = vrot.slane %v441, 1
        %v444 = vsel %vm396, %v439, %v443
        %v446 = vshrl.u32 %v336, 16
        %v448 = vshll.u32 %v336, 16
        %v450 = vrot.slane %v448, 1
        %v451 = vor.u32 %v446, %v450
        %v453 = vshll.u32 %v384, 16
        %v455 = vrot.slane %v453, 1
        %v456 = vsel %vm396, %v451, %v455
        %v458 = vshrl.u32 %v337, 16
        %v460 = vshll.u32 %v337, 16
        %v462 = vrot.slane %v460, 1
        %v463 = vor.u32 %v458, %v462
        %v465 = vshll.u32 %v385, 16
        %v467 = vrot.slane %v465, 1
        %v468 = vsel %vm396, %v463, %v467
        %v470 = vshrl.u32 %v338, 16
        %v472 = vshll.u32 %v338, 16
        %v474 = vrot.slane %v472, 1
        %v475 = vor.u32 %v470, %v474
        %v477 = vshll.u32 %v386, 16
        %v479 = vrot.slane %v477, 1
        %v480 = vsel %vm396, %v475, %v479
        %v482 = vshrl.u32 %v339, 16
        %v484 = vshll.u32 %v339, 16
        %v486 = vrot.slane %v484, 1
        %v487 = vor.u32 %v482, %v486
        %v489 = vshll.u32 %v387, 16
        %v491 = vrot.slane %v489, 1
        %v492 = vsel %vm396, %v487, %v491
        %v494 = vshrl.u32 %v340, 16
        %v496 = vshll.u32 %v340, 16
        %v498 = vrot.slane %v496, 1
        %v499 = vor.u32 %v494, %v498
        %v501 = vshll.u32 %v388, 16
        %v503 = vrot.slane %v501, 1
        %v504 = vsel %vm396, %v499, %v503
        %v506 = vshrl.u32 %v341, 16
        %v508 = vshll.u32 %v341, 16
        %v510 = vrot.slane %v508, 1
        %v511 = vor.u32 %v506, %v510
        %v513 = vshll.u32 %v389, 16
        %v515 = vrot.slane %v513, 1
        %v516 = vsel %vm396, %v511, %v515
        %v518 = vshrl.u32 %v342, 16
        %v520 = vshll.u32 %v342, 16
        %v522 = vrot.slane %v520, 1
        %v523 = vor.u32 %v518, %v522
        %v525 = vshll.u32 %v390, 16
        %v527 = vrot.slane %v525, 1
        %v528 = vsel %vm396, %v523, %v527
        %v530 = vshrl.u32 %v343, 16
        %v532 = vshll.u32 %v343, 16
        %v534 = vrot.slane %v532, 1
        %v535 = vor.u32 %v530, %v534
        %v537 = vshll.u32 %v391, 16
        %v539 = vrot.slane %v537, 1
        %v540 = vsel %vm396, %v535, %v539
        %v542 = vshrl.u32 %v344, 16
        %v544 = vshll.u32 %v344, 16
        %v546 = vrot.slane %v544, 1
        %v547 = vor.u32 %v542, %v546
        %v549 = vshll.u32 %v392, 16
        %v551 = vrot.slane %v549, 1
        %v552 = vsel %vm396, %v547, %v551
        %v554 = vshrl.u32 %v345, 16
        %v556 = vshll.u32 %v345, 16
        %v558 = vrot.slane %v556, 1
        %v559 = vor.u32 %v554, %v558
        %v561 = vshll.u32 %v393, 16
        %v563 = vrot.slane %v561, 1
        %v564 = vsel %vm396, %v559, %v563
        %v566 = vshrl.u32 %v346, 16
        %v568 = vshll.u32 %v346, 16
        %v570 = vrot.slane %v568, 1
        %v571 = vor.u32 %v566, %v570
        %v573 = vshll.u32 %v394, 16
        %v575 = vrot.slane %v573, 1
        %v576 = vsel %vm396, %v571, %v575
        %v578 = vshrl.u32 %v347, 16
        %v580 = vshll.u32 %v347, 16
        %v582 = vrot.slane %v580, 1
        %v583 = vor.u32 %v578, %v582
        %v585 = vshll.u32 %v395, 16
        %v587 = vrot.slane %v585, 1
        %v588 = vsel %vm396, %v583, %v587
        %589 = vrot.lane.b32.xlu0 %v408, 4
        %v590 = vpop.permute.xlu0 %589
        %591 = vrot.lane.b32.xlu0 %v420, 4
        %v592 = vpop.permute.xlu0 %591
        %593 = vrot.lane.b32.xlu0 %v432, 4
        %v594 = vpop.permute.xlu0 %593
        %595 = vrot.lane.b32.xlu0 %v444, 4
        %v596 = vpop.permute.xlu0 %595
        %597 = vrot.lane.b32.xlu0 %v456, 4
        %v598 = vpop.permute.xlu0 %597
        %599 = vrot.lane.b32.xlu0 %v468, 4
        %v600 = vpop.permute.xlu0 %599
        %601 = vrot.lane.b32.xlu0 %v480, 4
        %v602 = vpop.permute.xlu0 %601
        %603 = vrot.lane.b32.xlu0 %v492, 4
        %v604 = vpop.permute.xlu0 %603
        %605 = vrot.lane.b32.xlu0 %v504, 4
        %v606 = vpop.permute.xlu0 %605
        %607 = vrot.lane.b32.xlu0 %v516, 4
        %v608 = vpop.permute.xlu0 %607
        %609 = vrot.lane.b32.xlu0 %v528, 4
        %v610 = vpop.permute.xlu0 %609
        %611 = vrot.lane.b32.xlu0 %v540, 4
        %v612 = vpop.permute.xlu0 %611
        %613 = vrot.lane.b32.xlu0 %v552, 4
        %v614 = vpop.permute.xlu0 %613
        %615 = vrot.lane.b32.xlu0 %v564, 4
        %v616 = vpop.permute.xlu0 %615
        %617 = vrot.lane.b32.xlu0 %v576, 4
        %v618 = vpop.permute.xlu0 %617
        %619 = vrot.lane.b32.xlu0 %v588, 4
        %v620 = vpop.permute.xlu0 %619
        %vm621 = vcmask 1046528
        %v622 = vrot.slane %v332, 1
        %v623 = vrot.slane %v380, 1
        %v624 = vsel %vm621, %v622, %v623
        %v625 = vrot.slane %v333, 1
        %v626 = vrot.slane %v381, 1
        %v627 = vsel %vm621, %v625, %v626
        %v628 = vrot.slane %v334, 1
        %v629 = vrot.slane %v382, 1
        %v630 = vsel %vm621, %v628, %v629
        %v631 = vrot.slane %v335, 1
        %v632 = vrot.slane %v383, 1
        %v633 = vsel %vm621, %v631, %v632
        %v634 = vrot.slane %v336, 1
        %v635 = vrot.slane %v384, 1
        %v636 = vsel %vm621, %v634, %v635
        %v637 = vrot.slane %v337, 1
        %v638 = vrot.slane %v385, 1
        %v639 = vsel %vm621, %v637, %v638
        %v640 = vrot.slane %v338, 1
        %v641 = vrot.slane %v386, 1
        %v642 = vsel %vm621, %v640, %v641
        %v643 = vrot.slane %v339, 1
        %v644 = vrot.slane %v387, 1
        %v645 = vsel %vm621, %v643, %v644
        %v646 = vrot.slane %v340, 1
        %v647 = vrot.slane %v388, 1
        %v648 = vsel %vm621, %v646, %v647
        %v649 = vrot.slane %v341, 1
        %v650 = vrot.slane %v389, 1
        %v651 = vsel %vm621, %v649, %v650
        %v652 = vrot.slane %v342, 1
        %v653 = vrot.slane %v390, 1
        %v654 = vsel %vm621, %v652, %v653
        %v655 = vrot.slane %v343, 1
        %v656 = vrot.slane %v391, 1
        %v657 = vsel %vm621, %v655, %v656
        %v658 = vrot.slane %v344, 1
        %v659 = vrot.slane %v392, 1
        %v660 = vsel %vm621, %v658, %v659
        %v661 = vrot.slane %v345, 1
        %v662 = vrot.slane %v393, 1
        %v663 = vsel %vm621, %v661, %v662
        %v664 = vrot.slane %v346, 1
        %v665 = vrot.slane %v394, 1
        %v666 = vsel %vm621, %v664, %v665
        %v667 = vrot.slane %v347, 1
        %v668 = vrot.slane %v395, 1
        %v669 = vsel %vm621, %v667, %v668
        %670 = vrot.lane.b32.xlu0 %v624, 8
        %v671 = vpop.permute.xlu0 %670
        %672 = vrot.lane.b32.xlu0 %v627, 8
        %v673 = vpop.permute.xlu0 %672
        %674 = vrot.lane.b32.xlu0 %v630, 8
        %v675 = vpop.permute.xlu0 %674
        %676 = vrot.lane.b32.xlu0 %v633, 8
        %v677 = vpop.permute.xlu0 %676
        %678 = vrot.lane.b32.xlu0 %v636, 8
        %v679 = vpop.permute.xlu0 %678
        %680 = vrot.lane.b32.xlu0 %v639, 8
        %v681 = vpop.permute.xlu0 %680
        %682 = vrot.lane.b32.xlu0 %v642, 8
        %v683 = vpop.permute.xlu0 %682
        %684 = vrot.lane.b32.xlu0 %v645, 8
        %v685 = vpop.permute.xlu0 %684
        %686 = vrot.lane.b32.xlu0 %v648, 8
        %v687 = vpop.permute.xlu0 %686
        %688 = vrot.lane.b32.xlu0 %v651, 8
        %v689 = vpop.permute.xlu0 %688
        %690 = vrot.lane.b32.xlu0 %v654, 8
        %v691 = vpop.permute.xlu0 %690
        %692 = vrot.lane.b32.xlu0 %v657, 8
        %v693 = vpop.permute.xlu0 %692
        %694 = vrot.lane.b32.xlu0 %v660, 8
        %v695 = vpop.permute.xlu0 %694
        %696 = vrot.lane.b32.xlu0 %v663, 8
        %v697 = vpop.permute.xlu0 %696
        %698 = vrot.lane.b32.xlu0 %v666, 8
        %v699 = vpop.permute.xlu0 %698
        %700 = vrot.lane.b32.xlu0 %v669, 8
        %v701 = vpop.permute.xlu0 %700
        %v704 = vunpack.c.l.b16 %v262
        %v705 = vunpack.c.l.b16 %v263
        %v706 = vpack.c.b16 %v705, %v704
        %707 = vrot.lane.b32.xlu0 %v333, 12
        %v708 = vpop.permute.xlu0 %707
        %709 = vrot.lane.b32.xlu0 %v334, 12
        %v710 = vpop.permute.xlu0 %709
        %711 = vrot.lane.b32.xlu0 %v335, 12
        %v712 = vpop.permute.xlu0 %711
        %713 = vrot.lane.b32.xlu0 %v336, 12
        %v714 = vpop.permute.xlu0 %713
        %715 = vrot.lane.b32.xlu0 %v337, 12
        %v716 = vpop.permute.xlu0 %715
        %717 = vrot.lane.b32.xlu0 %v338, 12
        %v718 = vpop.permute.xlu0 %717
        %719 = vrot.lane.b32.xlu0 %v339, 12
        %v720 = vpop.permute.xlu0 %719
        %721 = vrot.lane.b32.xlu0 %v340, 12
        %v722 = vpop.permute.xlu0 %721
        %723 = vrot.lane.b32.xlu0 %v341, 12
        %v724 = vpop.permute.xlu0 %723
        %725 = vrot.lane.b32.xlu0 %v342, 12
        %v726 = vpop.permute.xlu0 %725
        %727 = vrot.lane.b32.xlu0 %v343, 12
        %v728 = vpop.permute.xlu0 %727
        %729 = vrot.lane.b32.xlu0 %v344, 12
        %v730 = vpop.permute.xlu0 %729
        %731 = vrot.lane.b32.xlu0 %v345, 12
        %v732 = vpop.permute.xlu0 %731
        %733 = vrot.lane.b32.xlu0 %v346, 12
        %v734 = vpop.permute.xlu0 %733
        %735 = vrot.lane.b32.xlu0 %v347, 12
        %v736 = vpop.permute.xlu0 %735
        %737 = vrot.lane.b32.xlu0 %v706, 12
        %v738 = vpop.permute.xlu0 %737
        %v740 = vunpack.c.l.b16 %v264
        %v741 = vpack.c.b16 %v740, %v740
        %v743 = vshrl.u32 %v706, 16
        %v745 = vshll.u32 %v706, 16
        %v747 = vrot.slane %v745, 1
        %v748 = vor.u32 %v743, %v747
        %v750 = vshll.u32 %v741, 16
        %v752 = vrot.slane %v750, 1
        %v753 = vsel %vm396, %v748, %v752
        %754 = vrot.lane.b32.xlu0 %v420, 16
        %v755 = vpop.permute.xlu0 %754
        %756 = vrot.lane.b32.xlu0 %v432, 16
        %v757 = vpop.permute.xlu0 %756
        %758 = vrot.lane.b32.xlu0 %v444, 16
        %v759 = vpop.permute.xlu0 %758
        %760 = vrot.lane.b32.xlu0 %v456, 16
        %v761 = vpop.permute.xlu0 %760
        %762 = vrot.lane.b32.xlu0 %v468, 16
        %v763 = vpop.permute.xlu0 %762
        %764 = vrot.lane.b32.xlu0 %v480, 16
        %v765 = vpop.permute.xlu0 %764
        %766 = vrot.lane.b32.xlu0 %v492, 16
        %v767 = vpop.permute.xlu0 %766
        %768 = vrot.lane.b32.xlu0 %v504, 16
        %v769 = vpop.permute.xlu0 %768
        %770 = vrot.lane.b32.xlu0 %v516, 16
        %v771 = vpop.permute.xlu0 %770
        %772 = vrot.lane.b32.xlu0 %v528, 16
        %v773 = vpop.permute.xlu0 %772
        %774 = vrot.lane.b32.xlu0 %v540, 16
        %v775 = vpop.permute.xlu0 %774
        %776 = vrot.lane.b32.xlu0 %v552, 16
        %v777 = vpop.permute.xlu0 %776
        %778 = vrot.lane.b32.xlu0 %v564, 16
        %v779 = vpop.permute.xlu0 %778
        %780 = vrot.lane.b32.xlu0 %v576, 16
        %v781 = vpop.permute.xlu0 %780
        %782 = vrot.lane.b32.xlu0 %v588, 16
        %v783 = vpop.permute.xlu0 %782
        %784 = vrot.lane.b32.xlu0 %v753, 16
        %v785 = vpop.permute.xlu0 %784
        %v786 = vrot.slane %v706, 1
        %v787 = vrot.slane %v741, 1
        %v788 = vsel %vm621, %v786, %v787
        %789 = vrot.lane.b32.xlu0 %v627, 20
        %v790 = vpop.permute.xlu0 %789
        %791 = vrot.lane.b32.xlu0 %v630, 20
        %v792 = vpop.permute.xlu0 %791
        %793 = vrot.lane.b32.xlu0 %v633, 20
        %v794 = vpop.permute.xlu0 %793
        %795 = vrot.lane.b32.xlu0 %v636, 20
        %v796 = vpop.permute.xlu0 %795
        %797 = vrot.lane.b32.xlu0 %v639, 20
        %v798 = vpop.permute.xlu0 %797
        %799 = vrot.lane.b32.xlu0 %v642, 20
        %v800 = vpop.permute.xlu0 %799
        %801 = vrot.lane.b32.xlu0 %v645, 20
        %v802 = vpop.permute.xlu0 %801
        %803 = vrot.lane.b32.xlu0 %v648, 20
        %v804 = vpop.permute.xlu0 %803
        %805 = vrot.lane.b32.xlu0 %v651, 20
        %v806 = vpop.permute.xlu0 %805
        %807 = vrot.lane.b32.xlu0 %v654, 20
        %v808 = vpop.permute.xlu0 %807
        %809 = vrot.lane.b32.xlu0 %v657, 20
        %v810 = vpop.permute.xlu0 %809
        %811 = vrot.lane.b32.xlu0 %v660, 20
        %v812 = vpop.permute.xlu0 %811
        %813 = vrot.lane.b32.xlu0 %v663, 20
        %v814 = vpop.permute.xlu0 %813
        %815 = vrot.lane.b32.xlu0 %v666, 20
        %v816 = vpop.permute.xlu0 %815
        %817 = vrot.lane.b32.xlu0 %v669, 20
        %v818 = vpop.permute.xlu0 %817
        %819 = vrot.lane.b32.xlu0 %v788, 20
        %v820 = vpop.permute.xlu0 %819
        %v823 = vunpack.c.l.b16 %v265
        %v824 = vunpack.c.l.b16 %v266
        %v825 = vpack.c.b16 %v824, %v823
        %826 = vrot.lane.b32.xlu0 %v334, 24
        %v827 = vpop.permute.xlu0 %826
        %828 = vrot.lane.b32.xlu0 %v335, 24
        %v829 = vpop.permute.xlu0 %828
        %830 = vrot.lane.b32.xlu0 %v336, 24
        %v831 = vpop.permute.xlu0 %830
        %832 = vrot.lane.b32.xlu0 %v337, 24
        %v833 = vpop.permute.xlu0 %832
        %834 = vrot.lane.b32.xlu0 %v338, 24
        %v835 = vpop.permute.xlu0 %834
        %836 = vrot.lane.b32.xlu0 %v339, 24
        %v837 = vpop.permute.xlu0 %836
        %838 = vrot.lane.b32.xlu0 %v340, 24
        %v839 = vpop.permute.xlu0 %838
        %840 = vrot.lane.b32.xlu0 %v341, 24
        %v841 = vpop.permute.xlu0 %840
        %842 = vrot.lane.b32.xlu0 %v342, 24
        %v843 = vpop.permute.xlu0 %842
        %844 = vrot.lane.b32.xlu0 %v343, 24
        %v845 = vpop.permute.xlu0 %844
        %846 = vrot.lane.b32.xlu0 %v344, 24
        %v847 = vpop.permute.xlu0 %846
        %848 = vrot.lane.b32.xlu0 %v345, 24
        %v849 = vpop.permute.xlu0 %848
        %850 = vrot.lane.b32.xlu0 %v346, 24
        %v851 = vpop.permute.xlu0 %850
        %852 = vrot.lane.b32.xlu0 %v347, 24
        %v853 = vpop.permute.xlu0 %852
        %854 = vrot.lane.b32.xlu0 %v706, 24
        %v855 = vpop.permute.xlu0 %854
        %856 = vrot.lane.b32.xlu0 %v825, 24
        %v857 = vpop.permute.xlu0 %856
        %v859 = vunpack.c.l.b16 %v267
        %v860 = vpack.c.b16 %v859, %v859
        %v862 = vshrl.u32 %v825, 16
        %v864 = vshll.u32 %v825, 16
        %v866 = vrot.slane %v864, 1
        %v867 = vor.u32 %v862, %v866
        %v869 = vshll.u32 %v860, 16
        %v871 = vrot.slane %v869, 1
        %v872 = vsel %vm396, %v867, %v871
        %873 = vrot.lane.b32.xlu0 %v432, 28
        %v874 = vpop.permute.xlu0 %873
        %875 = vrot.lane.b32.xlu0 %v444, 28
        %v876 = vpop.permute.xlu0 %875
        %877 = vrot.lane.b32.xlu0 %v456, 28
        %v878 = vpop.permute.xlu0 %877
        %879 = vrot.lane.b32.xlu0 %v468, 28
        %v880 = vpop.permute.xlu0 %879
        %881 = vrot.lane.b32.xlu0 %v480, 28
        %v882 = vpop.permute.xlu0 %881
        %883 = vrot.lane.b32.xlu0 %v492, 28
        %v884 = vpop.permute.xlu0 %883
        %885 = vrot.lane.b32.xlu0 %v504, 28
        %v886 = vpop.permute.xlu0 %885
        %887 = vrot.lane.b32.xlu0 %v516, 28
        %v888 = vpop.permute.xlu0 %887
        %889 = vrot.lane.b32.xlu0 %v528, 28
        %v890 = vpop.permute.xlu0 %889
        %891 = vrot.lane.b32.xlu0 %v540, 28
        %v892 = vpop.permute.xlu0 %891
        %893 = vrot.lane.b32.xlu0 %v552, 28
        %v894 = vpop.permute.xlu0 %893
        %895 = vrot.lane.b32.xlu0 %v564, 28
        %v896 = vpop.permute.xlu0 %895
        %897 = vrot.lane.b32.xlu0 %v576, 28
        %v898 = vpop.permute.xlu0 %897
        %899 = vrot.lane.b32.xlu0 %v588, 28
        %v900 = vpop.permute.xlu0 %899
        %901 = vrot.lane.b32.xlu0 %v753, 28
        %v902 = vpop.permute.xlu0 %901
        %903 = vrot.lane.b32.xlu0 %v872, 28
        %v904 = vpop.permute.xlu0 %903
        %v905 = vrot.slane %v825, 1
        %v906 = vrot.slane %v860, 1
        %v907 = vsel %vm621, %v905, %v906
        %908 = vrot.lane.b32.xlu0 %v630, 32
        %v909 = vpop.permute.xlu0 %908
        %910 = vrot.lane.b32.xlu0 %v633, 32
        %v911 = vpop.permute.xlu0 %910
        %912 = vrot.lane.b32.xlu0 %v636, 32
        %v913 = vpop.permute.xlu0 %912
        %914 = vrot.lane.b32.xlu0 %v639, 32
        %v915 = vpop.permute.xlu0 %914
        %916 = vrot.lane.b32.xlu0 %v642, 32
        %v917 = vpop.permute.xlu0 %916
        %918 = vrot.lane.b32.xlu0 %v645, 32
        %v919 = vpop.permute.xlu0 %918
        %920 = vrot.lane.b32.xlu0 %v648, 32
        %v921 = vpop.permute.xlu0 %920
        %922 = vrot.lane.b32.xlu0 %v651, 32
        %v923 = vpop.permute.xlu0 %922
        %924 = vrot.lane.b32.xlu0 %v654, 32
        %v925 = vpop.permute.xlu0 %924
        %926 = vrot.lane.b32.xlu0 %v657, 32
        %v927 = vpop.permute.xlu0 %926
        %928 = vrot.lane.b32.xlu0 %v660, 32
        %v929 = vpop.permute.xlu0 %928
        %930 = vrot.lane.b32.xlu0 %v663, 32
        %v931 = vpop.permute.xlu0 %930
        %932 = vrot.lane.b32.xlu0 %v666, 32
        %v933 = vpop.permute.xlu0 %932
        %934 = vrot.lane.b32.xlu0 %v669, 32
        %v935 = vpop.permute.xlu0 %934
        %936 = vrot.lane.b32.xlu0 %v788, 32
        %v937 = vpop.permute.xlu0 %936
        %938 = vrot.lane.b32.xlu0 %v907, 32
        %v939 = vpop.permute.xlu0 %938
        %vm940 = vcmask 31744
        %v942 = vsel %vm940, %v332, %v590
        %v944 = vsel %vm940, %v333, %v592
        %v946 = vsel %vm940, %v334, %v594
        %v948 = vsel %vm940, %v335, %v596
        %v950 = vsel %vm940, %v336, %v598
        %v952 = vsel %vm940, %v337, %v600
        %v954 = vsel %vm940, %v338, %v602
        %v956 = vsel %vm940, %v339, %v604
        %v958 = vsel %vm940, %v340, %v606
        %v960 = vsel %vm940, %v341, %v608
        %v962 = vsel %vm940, %v342, %v610
        %v964 = vsel %vm940, %v343, %v612
        %v966 = vsel %vm940, %v344, %v614
        %v968 = vsel %vm940, %v345, %v616
        %v970 = vsel %vm940, %v346, %v618
        %v972 = vsel %vm940, %v347, %v620
        %vm973 = vcmask 64512
        %v975 = vsel %vm973, %v942, %v671
        %v977 = vsel %vm973, %v944, %v673
        %v979 = vsel %vm973, %v946, %v675
        %v981 = vsel %vm973, %v948, %v677
        %v983 = vsel %vm973, %v950, %v679
        %v985 = vsel %vm973, %v952, %v681
        %v987 = vsel %vm973, %v954, %v683
        %v989 = vsel %vm973, %v956, %v685
        %v991 = vsel %vm973, %v958, %v687
        %v993 = vsel %vm973, %v960, %v689
        %v995 = vsel %vm973, %v962, %v691
        %v997 = vsel %vm973, %v964, %v693
        %v999 = vsel %vm973, %v966, %v695
        %v1001 = vsel %vm973, %v968, %v697
        %v1003 = vsel %vm973, %v970, %v699
        %v1005 = vsel %vm973, %v972, %v701
        %vm1006 = vcmask 97280
        %v1008 = vsel %vm1006, %v975, %v708
        %v1010 = vsel %vm1006, %v977, %v710
        %v1012 = vsel %vm1006, %v979, %v712
        %v1014 = vsel %vm1006, %v981, %v714
        %v1016 = vsel %vm1006, %v983, %v716
        %v1018 = vsel %vm1006, %v985, %v718
        %v1020 = vsel %vm1006, %v987, %v720
        %v1022 = vsel %vm1006, %v989, %v722
        %v1024 = vsel %vm1006, %v991, %v724
        %v1026 = vsel %vm1006, %v993, %v726
        %v1028 = vsel %vm1006, %v995, %v728
        %v1030 = vsel %vm1006, %v997, %v730
        %v1032 = vsel %vm1006, %v999, %v732
        %v1034 = vsel %vm1006, %v1001, %v734
        %v1036 = vsel %vm1006, %v1003, %v736
        %v1038 = vsel %vm1006, %v1005, %v738
        %vm1039 = vcmask 130048
        %v1041 = vsel %vm1039, %v1008, %v755
        %v1043 = vsel %vm1039, %v1010, %v757
        %v1045 = vsel %vm1039, %v1012, %v759
        %v1047 = vsel %vm1039, %v1014, %v761
        %v1049 = vsel %vm1039, %v1016, %v763
        %v1051 = vsel %vm1039, %v1018, %v765
        %v1053 = vsel %vm1039, %v1020, %v767
        %v1055 = vsel %vm1039, %v1022, %v769
        %v1057 = vsel %vm1039, %v1024, %v771
        %v1059 = vsel %vm1039, %v1026, %v773
        %v1061 = vsel %vm1039, %v1028, %v775
        %v1063 = vsel %vm1039, %v1030, %v777
        %v1065 = vsel %vm1039, %v1032, %v779
        %v1067 = vsel %vm1039, %v1034, %v781
        %v1069 = vsel %vm1039, %v1036, %v783
        %v1071 = vsel %vm1039, %v1038, %v785
        %vm1072 = vcmask 162816
        %v1074 = vsel %vm1072, %v1041, %v790
        %v1076 = vsel %vm1072, %v1043, %v792
        %v1078 = vsel %vm1072, %v1045, %v794
        %v1080 = vsel %vm1072, %v1047, %v796
        %v1082 = vsel %vm1072, %v1049, %v798
        %v1084 = vsel %vm1072, %v1051, %v800
        %v1086 = vsel %vm1072, %v1053, %v802
        %v1088 = vsel %vm1072, %v1055, %v804
        %v1090 = vsel %vm1072, %v1057, %v806
        %v1092 = vsel %vm1072, %v1059, %v808
        %v1094 = vsel %vm1072, %v1061, %v810
        %v1096 = vsel %vm1072, %v1063, %v812
        %v1098 = vsel %vm1072, %v1065, %v814
        %v1100 = vsel %vm1072, %v1067, %v816
        %v1102 = vsel %vm1072, %v1069, %v818
        %v1104 = vsel %vm1072, %v1071, %v820
        %vm1105 = vcmask 195584
        %v1107 = vsel %vm1105, %v1074, %v827
        %v1109 = vsel %vm1105, %v1076, %v829
        %v1111 = vsel %vm1105, %v1078, %v831
        %v1113 = vsel %vm1105, %v1080, %v833
        %v1115 = vsel %vm1105, %v1082, %v835
        %v1117 = vsel %vm1105, %v1084, %v837
        %v1119 = vsel %vm1105, %v1086, %v839
        %v1121 = vsel %vm1105, %v1088, %v841
        %v1123 = vsel %vm1105, %v1090, %v843
        %v1125 = vsel %vm1105, %v1092, %v845
        %v1127 = vsel %vm1105, %v1094, %v847
        %v1129 = vsel %vm1105, %v1096, %v849
        %v1131 = vsel %vm1105, %v1098, %v851
        %v1133 = vsel %vm1105, %v1100, %v853
        %v1135 = vsel %vm1105, %v1102, %v855
        %v1137 = vsel %vm1105, %v1104, %v857
        %vm1138 = vcmask 228352
        %v1140 = vsel %vm1138, %v1107, %v874
        %v1142 = vsel %vm1138, %v1109, %v876
        %v1144 = vsel %vm1138, %v1111, %v878
        %v1146 = vsel %vm1138, %v1113, %v880
        %v1148 = vsel %vm1138, %v1115, %v882
        %v1150 = vsel %vm1138, %v1117, %v884
        %v1152 = vsel %vm1138, %v1119, %v886
        %v1154 = vsel %vm1138, %v1121, %v888
        %v1156 = vsel %vm1138, %v1123, %v890
        %v1158 = vsel %vm1138, %v1125, %v892
        %v1160 = vsel %vm1138, %v1127, %v894
        %v1162 = vsel %vm1138, %v1129, %v896
        %v1164 = vsel %vm1138, %v1131, %v898
        %v1166 = vsel %vm1138, %v1133, %v900
        %v1168 = vsel %vm1138, %v1135, %v902
        %v1170 = vsel %vm1138, %v1137, %v904
        %vm1171 = vcmask 261120
        %v1173 = vsel %vm1171, %v1140, %v909
        %v1175 = vsel %vm1171, %v1142, %v911
        %v1177 = vsel %vm1171, %v1144, %v913
        %v1179 = vsel %vm1171, %v1146, %v915
        %v1181 = vsel %vm1171, %v1148, %v917
        %v1183 = vsel %vm1171, %v1150, %v919
        %v1185 = vsel %vm1171, %v1152, %v921
        %v1187 = vsel %vm1171, %v1154, %v923
        %v1189 = vsel %vm1171, %v1156, %v925
        %v1191 = vsel %vm1171, %v1158, %v927
        %v1193 = vsel %vm1171, %v1160, %v929
        %v1195 = vsel %vm1171, %v1162, %v931
        %v1197 = vsel %vm1171, %v1164, %v933
        %v1199 = vsel %vm1171, %v1166, %v935
        %v1201 = vsel %vm1171, %v1168, %v937
        %v1203 = vsel %vm1171, %v1170, %v939
        %vm1204 = vcmask 293888
        %v1206 = vsel %vm1204, %v1173, 0
        %v1208 = vsel %vm1204, %v1175, 0
        %v1210 = vsel %vm1204, %v1177, 0
        %v1212 = vsel %vm1204, %v1179, 0
        %v1214 = vsel %vm1204, %v1181, 0
        %v1216 = vsel %vm1204, %v1183, 0
        %v1218 = vsel %vm1204, %v1185, 0
        %v1220 = vsel %vm1204, %v1187, 0
        %v1222 = vsel %vm1204, %v1189, 0
        %v1224 = vsel %vm1204, %v1191, 0
        %v1226 = vsel %vm1204, %v1193, 0
        %v1228 = vsel %vm1204, %v1195, 0
        %v1230 = vsel %vm1204, %v1197, 0
        %v1232 = vsel %vm1204, %v1199, 0
        %v1234 = vsel %vm1204, %v1201, 0
        %v1236 = vsel %vm1204, %v1203, 0
        %v1238 = vld [vmem:[%s1] sm:$0xf]
        %v1239 = vld [vmem:[%s1 + $0x4] sm:$0xf]
        %v1240 = vld [vmem:[%s1 + $0x8] sm:$0xf]
        %v1241 = vld [vmem:[%s1 + $0xc] sm:$0xf]
        %v1242 = vld [vmem:[%s1 + $0x10] sm:$0xf]
        %v1243 = vld [vmem:[%s1 + $0x14] sm:$0xf]
        %v1244 = vld [vmem:[%s1 + $0x18] sm:$0xf]
        %v1245 = vld [vmem:[%s1 + $0x1c] sm:$0xf]
        %v1246 = vld [vmem:[%s1 + $0x20] sm:$0xf]
        %v1247 = vld [vmem:[%s1 + $0x24] sm:$0xf]
        %v1248 = vld [vmem:[%s1 + $0x28] sm:$0xf]
        %v1249 = vld [vmem:[%s1 + $0x2c] sm:$0xf]
        %v1250 = vld [vmem:[%s1 + $0x30] sm:$0xf]
        %v1251 = vld [vmem:[%s1 + $0x34] sm:$0xf]
        %v1252 = vld [vmem:[%s1 + $0x38] sm:$0xf]
        %v1253 = vld [vmem:[%s1 + $0x3c] sm:$0xf]
        %v1270 = vunpack.c.l.b16 %v1238
        %v1271 = vunpack.c.l.b16 %v1239
        %v1272 = vunpack.c.l.b16 %v1240
        %v1273 = vunpack.c.l.b16 %v1241
        %v1274 = vunpack.c.l.b16 %v1242
        %v1275 = vunpack.c.l.b16 %v1243
        %v1276 = vunpack.c.l.b16 %v1244
        %v1277 = vunpack.c.l.b16 %v1245
        %v1278 = vunpack.c.l.b16 %v1246
        %v1279 = vunpack.c.l.b16 %v1247
        %v1280 = vunpack.c.l.b16 %v1248
        %v1281 = vunpack.c.l.b16 %v1249
        %v1282 = vunpack.c.l.b16 %v1250
        %v1283 = vunpack.c.l.b16 %v1251
        %v1284 = vunpack.c.l.b16 %v1252
        %v1285 = vunpack.c.l.b16 %v1253
        %v1286 = vpack.c.b16 %v1271, %v1270
        %v1287 = vpack.c.b16 %v1273, %v1272
        %v1288 = vpack.c.b16 %v1275, %v1274
        %v1289 = vpack.c.b16 %v1277, %v1276
        %v1290 = vpack.c.b16 %v1279, %v1278
        %v1291 = vpack.c.b16 %v1281, %v1280
        %v1292 = vpack.c.b16 %v1283, %v1282
        %v1293 = vpack.c.b16 %v1285, %v1284
        %1302 = vmatpush.bf16.msra.mxu0 %v1293
        %1303 = vmatpush.bf16.msra.mxu0 %v1292
        %1304 = vmatpush.bf16.msra.mxu0 %v1291
        %1305 = vmatpush.bf16.msra.mxu0 %v1290
        %1306 = vmatpush.bf16.msra.mxu0 %v1289
        %1307 = vmatpush.bf16.msra.mxu0 %v1288
        %1308 = vmatpush.bf16.msra.mxu0 %v1287
        %1309 = vmatpush.bf16.msra.mxu0 %v1286
        %1310 = vmatmul.bf16.gmra.mxu0 %v1206
        %v1311 = vpop.f32.mrf.mxu0
        %v1312 = vadd.f32 0.0, %v1311
        %v1313 = vpop.f32.mrf.mxu0
        %v1314 = vadd.f32 0.0, %v1313
        %1315 = vmatmul.bf16.gmra.mxu0 %v1208
        %v1316 = vpop.f32.mrf.mxu0
        %v1317 = vadd.f32 0.0, %v1316
        %v1318 = vpop.f32.mrf.mxu0
        %v1319 = vadd.f32 0.0, %v1318
        %1320 = vmatmul.bf16.gmra.mxu0 %v1210
        %v1321 = vpop.f32.mrf.mxu0
        %v1322 = vadd.f32 0.0, %v1321
        %v1323 = vpop.f32.mrf.mxu0
        %v1324 = vadd.f32 0.0, %v1323
        %1325 = vmatmul.bf16.gmra.mxu0 %v1212
        %v1326 = vpop.f32.mrf.mxu0
        %v1327 = vadd.f32 0.0, %v1326
        %v1328 = vpop.f32.mrf.mxu0
        %v1329 = vadd.f32 0.0, %v1328
        %1330 = vmatmul.bf16.gmra.mxu0 %v1214
        %v1331 = vpop.f32.mrf.mxu0
        %v1332 = vadd.f32 0.0, %v1331
        %v1333 = vpop.f32.mrf.mxu0
        %v1334 = vadd.f32 0.0, %v1333
        %1335 = vmatmul.bf16.gmra.mxu0 %v1216
        %v1336 = vpop.f32.mrf.mxu0
        %v1337 = vadd.f32 0.0, %v1336
        %v1338 = vpop.f32.mrf.mxu0
        %v1339 = vadd.f32 0.0, %v1338
        %1340 = vmatmul.bf16.gmra.mxu0 %v1218
        %v1341 = vpop.f32.mrf.mxu0
        %v1342 = vadd.f32 0.0, %v1341
        %v1343 = vpop.f32.mrf.mxu0
        %v1344 = vadd.f32 0.0, %v1343
        %1345 = vmatmul.bf16.gmra.mxu0 %v1220
        %v1346 = vpop.f32.mrf.mxu0
        %v1347 = vadd.f32 0.0, %v1346
        %v1348 = vpop.f32.mrf.mxu0
        %v1349 = vadd.f32 0.0, %v1348
        %1350 = vmatmul.bf16.gmra.mxu0 %v1222
        %v1351 = vpop.f32.mrf.mxu0
        %v1352 = vadd.f32 0.0, %v1351
        %v1353 = vpop.f32.mrf.mxu0
        %v1354 = vadd.f32 0.0, %v1353
        %1355 = vmatmul.bf16.gmra.mxu0 %v1224
        %v1356 = vpop.f32.mrf.mxu0
        %v1357 = vadd.f32 0.0, %v1356
        %v1358 = vpop.f32.mrf.mxu0
        %v1359 = vadd.f32 0.0, %v1358
        %1360 = vmatmul.bf16.gmra.mxu0 %v1226
        %v1361 = vpop.f32.mrf.mxu0
        %v1362 = vadd.f32 0.0, %v1361
        %v1363 = vpop.f32.mrf.mxu0
        %v1364 = vadd.f32 0.0, %v1363
        %1365 = vmatmul.bf16.gmra.mxu0 %v1228
        %v1366 = vpop.f32.mrf.mxu0
        %v1367 = vadd.f32 0.0, %v1366
        %v1368 = vpop.f32.mrf.mxu0
        %v1369 = vadd.f32 0.0, %v1368
        %1370 = vmatmul.bf16.gmra.mxu0 %v1230
        %v1371 = vpop.f32.mrf.mxu0
        %v1372 = vadd.f32 0.0, %v1371
        %v1373 = vpop.f32.mrf.mxu0
        %v1374 = vadd.f32 0.0, %v1373
        %1375 = vmatmul.bf16.gmra.mxu0 %v1232
        %v1376 = vpop.f32.mrf.mxu0
        %v1377 = vadd.f32 0.0, %v1376
        %v1378 = vpop.f32.mrf.mxu0
        %v1379 = vadd.f32 0.0, %v1378
        %1380 = vmatmul.bf16.gmra.mxu0 %v1234
        %v1381 = vpop.f32.mrf.mxu0
        %v1382 = vadd.f32 0.0, %v1381
        %v1383 = vpop.f32.mrf.mxu0
        %v1384 = vadd.f32 0.0, %v1383
        %1385 = vmatmul.bf16.gmra.mxu0 %v1236
        %v1386 = vpop.f32.mrf.mxu0
        %v1387 = vadd.f32 0.0, %v1386
        %v1388 = vpop.f32.mrf.mxu0
        %v1389 = vadd.f32 0.0, %v1388
        %1390 = vdwg.mxu0
        %v1391 = vpack.c.bf16 %v1312, %v1312
        %v1392 = vpack.c.bf16 %v1314, %v1314
        %v1393 = vpack.c.bf16 %v1317, %v1317
        %v1394 = vpack.c.bf16 %v1319, %v1319
        %v1395 = vpack.c.bf16 %v1322, %v1322
        %v1396 = vpack.c.bf16 %v1324, %v1324
        %v1397 = vpack.c.bf16 %v1327, %v1327
        %v1398 = vpack.c.bf16 %v1329, %v1329
        %v1399 = vpack.c.bf16 %v1332, %v1332
        %v1400 = vpack.c.bf16 %v1334, %v1334
        %v1401 = vpack.c.bf16 %v1337, %v1337
        %v1402 = vpack.c.bf16 %v1339, %v1339
        %v1403 = vpack.c.bf16 %v1342, %v1342
        %v1404 = vpack.c.bf16 %v1344, %v1344
        %v1405 = vpack.c.bf16 %v1347, %v1347
        %v1406 = vpack.c.bf16 %v1349, %v1349
        %v1407 = vpack.c.bf16 %v1352, %v1352
        %v1408 = vpack.c.bf16 %v1354, %v1354
        %v1409 = vpack.c.bf16 %v1357, %v1357
        %v1410 = vpack.c.bf16 %v1359, %v1359
        %v1411 = vpack.c.bf16 %v1362, %v1362
        %v1412 = vpack.c.bf16 %v1364, %v1364
        %v1413 = vpack.c.bf16 %v1367, %v1367
        %v1414 = vpack.c.bf16 %v1369, %v1369
        %v1415 = vpack.c.bf16 %v1372, %v1372
        %v1416 = vpack.c.bf16 %v1374, %v1374
        %v1417 = vpack.c.bf16 %v1377, %v1377
        %v1418 = vpack.c.bf16 %v1379, %v1379
        %v1419 = vpack.c.bf16 %v1382, %v1382
        %v1420 = vpack.c.bf16 %v1384, %v1384
        %v1421 = vpack.c.bf16 %v1387, %v1387
        %v1422 = vpack.c.bf16 %v1389, %v1389
        %vm1423 = vcmask 60416
        %1424 = vst.msk [vmem:[%s207] sm:$0xf] %vm1423, %v1391
        %1425 = vst.msk [vmem:[%s207 + $0x4] sm:$0xf] %vm1423, %v1392
        %1426 = vst.msk [vmem:[%s207 + $0x8] sm:$0xf] %vm1423, %v1393
        %1427 = vst.msk [vmem:[%s207 + $0xc] sm:$0xf] %vm1423, %v1394
        %1428 = vst.msk [vmem:[%s207 + $0x10] sm:$0xf] %vm1423, %v1395
        %1429 = vst.msk [vmem:[%s207 + $0x14] sm:$0xf] %vm1423, %v1396
        %1430 = vst.msk [vmem:[%s207 + $0x18] sm:$0xf] %vm1423, %v1397
        %1431 = vst.msk [vmem:[%s207 + $0x1c] sm:$0xf] %vm1423, %v1398
        %1432 = vst.msk [vmem:[%s207 + $0x20] sm:$0xf] %vm1423, %v1399
        %1433 = vst.msk [vmem:[%s207 + $0x24] sm:$0xf] %vm1423, %v1400
        %1434 = vst.msk [vmem:[%s207 + $0x28] sm:$0xf] %vm1423, %v1401
        %1435 = vst.msk [vmem:[%s207 + $0x2c] sm:$0xf] %vm1423, %v1402
        %1436 = vst.msk [vmem:[%s207 + $0x30] sm:$0xf] %vm1423, %v1403
        %1437 = vst.msk [vmem:[%s207 + $0x34] sm:$0xf] %vm1423, %v1404
        %1438 = vst.msk [vmem:[%s207 + $0x38] sm:$0xf] %vm1423, %v1405
        %1439 = vst.msk [vmem:[%s207 + $0x3c] sm:$0xf] %vm1423, %v1406
        %1440 = vst.msk [vmem:[%s207 + $0x40] sm:$0xf] %vm1423, %v1407
        %1441 = vst.msk [vmem:[%s207 + $0x44] sm:$0xf] %vm1423, %v1408
        %1442 = vst.msk [vmem:[%s207 + $0x48] sm:$0xf] %vm1423, %v1409
        %1443 = vst.msk [vmem:[%s207 + $0x4c] sm:$0xf] %vm1423, %v1410
        %1444 = vst.msk [vmem:[%s207 + $0x50] sm:$0xf] %vm1423, %v1411
        %1445 = vst.msk [vmem:[%s207 + $0x54] sm:$0xf] %vm1423, %v1412
        %1446 = vst.msk [vmem:[%s207 + $0x58] sm:$0xf] %vm1423, %v1413
        %1447 = vst.msk [vmem:[%s207 + $0x5c] sm:$0xf] %vm1423, %v1414
        %1448 = vst.msk [vmem:[%s207 + $0x60] sm:$0xf] %vm1423, %v1415
        %1449 = vst.msk [vmem:[%s207 + $0x64] sm:$0xf] %vm1423, %v1416
        %1450 = vst.msk [vmem:[%s207 + $0x68] sm:$0xf] %vm1423, %v1417
        %1451 = vst.msk [vmem:[%s207 + $0x6c] sm:$0xf] %vm1423, %v1418
        %1452 = vst.msk [vmem:[%s207 + $0x70] sm:$0xf] %vm1423, %v1419
        %1453 = vst.msk [vmem:[%s207 + $0x74] sm:$0xf] %vm1423, %v1420
        %1454 = vst.msk [vmem:[%s207 + $0x78] sm:$0xf] %vm1423, %v1421
        %1455 = vst.msk [vmem:[%s207 + $0x7c] sm:$0xf] %vm1423, %v1422
        %v1456 = vadd.f32 %v1312, %v1314
        %v1457 = vadd.f32 %v1456, %v1317
        %v1458 = vadd.f32 %v1457, %v1319
        %v1459 = vadd.f32 %v1458, %v1322
        %v1460 = vadd.f32 %v1459, %v1324
        %v1461 = vadd.f32 %v1460, %v1327
        %v1462 = vadd.f32 %v1461, %v1329
        %v1463 = vadd.f32 %v1462, %v1332
        %v1464 = vadd.f32 %v1463, %v1334
        %v1465 = vadd.f32 %v1464, %v1337
        %v1466 = vadd.f32 %v1465, %v1339
        %v1467 = vadd.f32 %v1466, %v1342
        %v1468 = vadd.f32 %v1467, %v1344
        %v1469 = vadd.f32 %v1468, %v1347
        %v1470 = vadd.f32 %v1469, %v1349
        %v1471 = vadd.f32 %v1470, %v1352
        %v1472 = vadd.f32 %v1471, %v1354
        %v1473 = vadd.f32 %v1472, %v1357
        %v1474 = vadd.f32 %v1473, %v1359
        %v1475 = vadd.f32 %v1474, %v1362
        %v1476 = vadd.f32 %v1475, %v1364
        %v1477 = vadd.f32 %v1476, %v1367
        %v1478 = vadd.f32 %v1477, %v1369
        %v1479 = vadd.f32 %v1478, %v1372
        %v1480 = vadd.f32 %v1479, %v1374
        %v1481 = vadd.f32 %v1480, %v1377
        %v1482 = vadd.f32 %v1481, %v1379
        %v1483 = vadd.f32 %v1482, %v1382
        %v1484 = vadd.f32 %v1483, %v1384
        %v1485 = vadd.f32 %v1484, %v1387
        %v1486 = vadd.f32 %v1485, %v1389
        %v1487 = vrot.slane %v1486, 4
        %v1488 = vadd.f32 %v1486, %v1487
        %v1489 = vrot.slane %v1488, 2
        %v1490 = vadd.f32 %v1488, %v1489
        %v1491 = vrot.slane %v1490, 1
        %v1492 = vadd.f32 %v1490, %v1491
        %v1493 = vmul.f32 %v1312, %v1312
        %v1494 = vmul.f32 %v1314, %v1314
        %v1495 = vmul.f32 %v1317, %v1317
        %v1496 = vmul.f32 %v1319, %v1319
        %v1497 = vmul.f32 %v1322, %v1322
        %v1498 = vmul.f32 %v1324, %v1324
        %v1499 = vmul.f32 %v1327, %v1327
        %v1500 = vmul.f32 %v1329, %v1329
        %v1501 = vmul.f32 %v1332, %v1332
        %v1502 = vmul.f32 %v1334, %v1334
        %v1503 = vmul.f32 %v1337, %v1337
        %v1504 = vmul.f32 %v1339, %v1339
        %v1505 = vmul.f32 %v1342, %v1342
        %v1506 = vmul.f32 %v1344, %v1344
        %v1507 = vmul.f32 %v1347, %v1347
        %v1508 = vmul.f32 %v1349, %v1349
        %v1509 = vmul.f32 %v1352, %v1352
        %v1510 = vmul.f32 %v1354, %v1354
        %v1511 = vmul.f32 %v1357, %v1357
        %v1512 = vmul.f32 %v1359, %v1359
        %v1513 = vmul.f32 %v1362, %v1362
        %v1514 = vmul.f32 %v1364, %v1364
        %v1515 = vmul.f32 %v1367, %v1367
        %v1516 = vmul.f32 %v1369, %v1369
        %v1517 = vmul.f32 %v1372, %v1372
        %v1518 = vmul.f32 %v1374, %v1374
        %v1519 = vmul.f32 %v1377, %v1377
        %v1520 = vmul.f32 %v1379, %v1379
        %v1521 = vmul.f32 %v1382, %v1382
        %v1522 = vmul.f32 %v1384, %v1384
        %v1523 = vmul.f32 %v1387, %v1387
        %v1524 = vmul.f32 %v1389, %v1389
        %v1525 = vadd.f32 %v1493, %v1494
        %v1526 = vadd.f32 %v1525, %v1495
        %v1527 = vadd.f32 %v1526, %v1496
        %v1528 = vadd.f32 %v1527, %v1497
        %v1529 = vadd.f32 %v1528, %v1498
        %v1530 = vadd.f32 %v1529, %v1499
        %v1531 = vadd.f32 %v1530, %v1500
        %v1532 = vadd.f32 %v1531, %v1501
        %v1533 = vadd.f32 %v1532, %v1502
        %v1534 = vadd.f32 %v1533, %v1503
        %v1535 = vadd.f32 %v1534, %v1504
        %v1536 = vadd.f32 %v1535, %v1505
        %v1537 = vadd.f32 %v1536, %v1506
        %v1538 = vadd.f32 %v1537, %v1507
        %v1539 = vadd.f32 %v1538, %v1508
        %v1540 = vadd.f32 %v1539, %v1509
        %v1541 = vadd.f32 %v1540, %v1510
        %v1542 = vadd.f32 %v1541, %v1511
        %v1543 = vadd.f32 %v1542, %v1512
        %v1544 = vadd.f32 %v1543, %v1513
        %v1545 = vadd.f32 %v1544, %v1514
        %v1546 = vadd.f32 %v1545, %v1515
        %v1547 = vadd.f32 %v1546, %v1516
        %v1548 = vadd.f32 %v1547, %v1517
        %v1549 = vadd.f32 %v1548, %v1518
        %v1550 = vadd.f32 %v1549, %v1519
        %v1551 = vadd.f32 %v1550, %v1520
        %v1552 = vadd.f32 %v1551, %v1521
        %v1553 = vadd.f32 %v1552, %v1522
        %v1554 = vadd.f32 %v1553, %v1523
        %v1555 = vadd.f32 %v1554, %v1524
        %v1556 = vrot.slane %v1555, 4
        %v1557 = vadd.f32 %v1555, %v1556
        %v1558 = vrot.slane %v1557, 2
        %v1559 = vadd.f32 %v1557, %v1558
        %v1560 = vrot.slane %v1559, 1
        %v1561 = vadd.f32 %v1559, %v1560
        %vm1562 = vcmask 1040384
        %v1563 = vsel %vm1562, %v1492, %v1561
        %1564 = vst [vmem:[%s192] sm:$0x3] %v1563
        %s1565 = smul.u32 16, %s23
        %p1566 = scmp.lt.s32.totalorder %s22, 1
        %s1567 = scalar_select %p1566, %s22, 1
        %p1568 = scmp.lt.s32.totalorder %s1565, 15
        %s1569 = scalar_select %p1568, %s1565, 15
        %s1570 = smul.addr %s1569, 2
        %s1571 = smul.addr %s1567, 32
        %s1572 = sadd.s32 %s1570, %s1571
        %s1573 = smul.addr %s1572, 4
        %s1574 = scalar_lea.vmem %s2, %s1573
        %s1575 = sand.u32 %s115, 1
        %s1576 = scalar_lea.sflag [#allocation3], %s1575
        %s1577 = sand.u32 %s115, 1
        %s1578 = smul.addr %s1577, 2
        %s1579 = scalar_lea.vmem [#allocation2], %s1578
        // Predicated region
        $region29: #{tpu_custom_call.1} parent=27 // pred_check
          %p1580 = pneg %p97
        $region30: #{tpu_custom_call.1} parent=27 // pred_check_branch
          %1582 = sbr.rel (%p1580) target = $region32
        $region31: #{tpu_custom_call.1} parent=27 // pred_region
          %s1583 = smul.u32 16, %s23
        $region32: #{tpu_custom_call.1} parent=27 // pred_fallthru
          _
        // Predicated region
        $region33: #{tpu_custom_call.1} parent=27 // pred_check
          %p1584 = pneg %p125
        $region34: #{tpu_custom_call.1} parent=27 // pred_check_branch
          %1586 = sbr.rel (%p1584) target = $region36
        $region35: #{tpu_custom_call.1} parent=27 // pred_region
          %1588 = vsyncadd %s1576, 0
          %s1589 = sadd.s32 %s23, %s22
          %s1590 = smul.addr %s1589, 2
          %s1591 = scalar_lea.hbm %s3, %s1590
          %s1593 = sshll.u32 %s1579, 4
          %s1594 = int_to_ptr.vmem [resolvable:$true] %s1593
          %s1595 = sshll.u32 %s1591, 4
          %s1596 = int_to_ptr.hbm [resolvable:$true] %s1595
          %1598 = dma.vmem_to_hbm [thread:$0]  %s1594, 32, %s1596, %s1576
        $region36: #{tpu_custom_call.1} parent=27 // pred_fallthru
          _
      $region28: #{tpu_custom_call.1} parent=5 // pred_fallthru
        _
      %p1599 = scmp.le.s32.totalorder 2, %s13
      // Predicated region
      $region37: #{tpu_custom_call.1} parent=5 // pred_check
        %p1600 = pneg %p1599
      $region38: #{tpu_custom_call.1} parent=5 // pred_check_branch
        %1602 = sbr.rel (%p1600) target = $region40
      $region39: #{tpu_custom_call.1} parent=5 // pred_region
        %s1603 = ssub.s32 %s13, 2
        // Predicated region
        $region41: #{tpu_custom_call.1} parent=39 // pred_check
          %p1604 = pneg %p103
        $region42: #{tpu_custom_call.1} parent=39 // pred_check_branch
          %1606 = sbr.rel (%p1604) target = $region44
        $region43: #{tpu_custom_call.1} parent=39 // pred_region
          %s1607 = smul.u32 16, %s25
          %p1608 = scmp.lt.s32.totalorder %s24, 1
          %s1609 = scalar_select %p1608, %s24, 1
          %p1610 = scmp.lt.s32.totalorder %s1607, 15
          %s1611 = scalar_select %p1610, %s1607, 15
          %s1612 = smul.addr %s1611, 2
          %s1613 = smul.addr %s1609, 32
          %s1614 = sadd.s32 %s1612, %s1613
          %s1615 = smul.addr %s1614, 4
          %s1616 = scalar_lea.vmem %s2, %s1615
        $region44: #{tpu_custom_call.1} parent=39 // pred_fallthru
          _
        // Predicated region
        $region45: #{tpu_custom_call.1} parent=39 // pred_check
          %p1617 = pneg %p131
        $region46: #{tpu_custom_call.1} parent=39 // pred_check_branch
          %1619 = sbr.rel (%p1617) target = $region48
        $region47: #{tpu_custom_call.1} parent=39 // pred_region
          %s1620 = sand.u32 %s116, 1
          %s1621 = scalar_lea.sflag [#allocation3], %s1620
          %s1622 = sand.u32 %s116, 1
          %s1623 = smul.addr %s1622, 2
          %s1624 = scalar_lea.vmem [#allocation2], %s1623
          %1626 = dma.done %s1621, 32
        $region48: #{tpu_custom_call.1} parent=39 // pred_fallthru
          _
      $region40: #{tpu_custom_call.1} parent=5 // pred_fallthru
        _
    $region6: #{tpu_custom_call.1} parent=1 // loop_footer
      %s17 = sadd.s32 1, %s13
    $region7: #{tpu_custom_call.1} parent=1 // loop_footer_branch
      %12 = sbr.rel target = $region3
    $region8: #{tpu_custom_call.1} parent=1 // loop_exit
      _
    %1627 = vsyncpa [#allocation3], 1
    %s1628 = scalar_lea.sflag [#allocation3], 1
    %1629 = vsyncpa %s1628, 1

</llo_original>
